<compile_context>
chip_gen: v5e
topology: v5e:2x2
jax: 0.10.0
libtpu: 0.0.40
codegen_flags: <defaults>
</compile_context>

<pallas_src>
import jax
import jax.numpy as jnp
from jax.experimental import pallas as pl
from jax.experimental.pallas import tpu as pltpu

DIMS = [784, 512, 256, 128, 64, 10]   # logical layer widths (matches the PyTorch module)
PAD_IN = 896                          # 784 padded to 7*128 (lane-dense layer-1 K)
PAD_H4 = 128                          # layer-4 width 64 padded to 128
PAD_OUT = 128                         # logits 10 padded to 128 (lane-dense output store)


def _round_up(a, m):
    return (a + m - 1) // m * m


def mlp_kernel(x_ref,
               w1, b1, w2, b2, w3, b3, w4, b4, w5, b5,
               o_ref):
    # Weights (~1.3 MB bf16) are fully resident in VMEM; the whole 5-layer forward
    # for one batch tile is a straight chain of bf16 MXU matmuls with f32 accumulate,
    # bias add + ReLU in f32 on the VPU, re-quantizing activations to bf16 between
    # layers for MXU throughput.
    def layer(h_bf16, w_ref, b_ref, relu):
        z = jnp.dot(h_bf16, w_ref[...], preferred_element_type=jnp.float32)
        z = z + b_ref[...]                      # bias in f32
        if relu:
            z = jnp.maximum(z, 0.0)             # ReLU in f32 (v5e-safe)
        return z

    h = layer(x_ref[...], w1, b1, True).astype(jnp.bfloat16)
    h = layer(h, w2, b2, True).astype(jnp.bfloat16)
    h = layer(h, w3, b3, True).astype(jnp.bfloat16)
    h = layer(h, w4, b4, True).astype(jnp.bfloat16)
    o_ref[...] = layer(h, w5, b5, False)        # padded (tm, 128) f32 logits


def mnist_model_forward(x, params, *, tm=512):
    """x: any shape flattening to 784 features per row (e.g. (B, 1, 28, 28)).
    params: 5 pairs (w, b); w stored (in, out) [transpose of torch Linear], b (1, out), f32."""
    x2d = x.reshape(-1, DIMS[0]).astype(jnp.float32)
    B = x2d.shape[0]

    # Clamp the batch tile to the (8-rounded) batch and pad the batch so the grid
    # divides evenly; with large batches this keeps tm at 512 and grid >= 2 (megacore).
    tm = min(tm, _round_up(B, 8))
    B_pad = _round_up(B, tm)

    # Zero-pad x to (B_pad, 896) and cast to bf16 for the MXU.
    x_p = jnp.pad(x2d, ((0, B_pad - B), (0, PAD_IN - DIMS[0]))).astype(jnp.bfloat16)

    # Zero-pad weights/biases to lane-dense shapes. Zero padding is exact:
    # padded x columns hit padded (zero) W1 rows; padded layer-4 columns are 0 after
    # ReLU and feed padded (zero) W5 rows; padded logit columns are sliced away.
    (w1, b1), (w2, b2), (w3, b3), (w4, b4), (w5, b5) = params
    w1p = jnp.pad(w1, ((0, PAD_IN - DIMS[0]), (0, 0))).astype(jnp.bfloat16)
    b1p = b1.astype(jnp.float32)
    w2p = w2.astype(jnp.bfloat16)
    b2p = b2.astype(jnp.float32)
    w3p = w3.astype(jnp.bfloat16)
    b3p = b3.astype(jnp.float32)
    w4p = jnp.pad(w4, ((0, 0), (0, PAD_H4 - DIMS[4]))).astype(jnp.bfloat16)
    b4p = jnp.pad(b4, ((0, 0), (0, PAD_H4 - DIMS[4]))).astype(jnp.float32)
    w5p = jnp.pad(w5, ((0, PAD_H4 - DIMS[4]), (0, PAD_OUT - DIMS[5]))).astype(jnp.bfloat16)
    b5p = jnp.pad(b5, ((0, 0), (0, PAD_OUT - DIMS[5]))).astype(jnp.float32)

    flat_params = [w1p, b1p, w2p, b2p, w3p, b3p, w4p, b4p, w5p, b5p]

    # Batch tile moves with the grid index; weights/biases are whole-array blocks
    # with a constant index_map (block_shape == full dims, so no (8,128) issue and
    # they are not re-fetched per grid step).
    in_specs = [pl.BlockSpec((tm, PAD_IN), lambda i: (i, 0))]
    for p in flat_params:
        in_specs.append(pl.BlockSpec(p.shape, lambda i: (0, 0)))

    out_spec = pl.BlockSpec((tm, PAD_OUT), lambda i: (i, 0))

    out_padded = pl.pallas_call(
        mlp_kernel,
        out_shape=jax.ShapeDtypeStruct((B_pad, PAD_OUT), jnp.float32),
        grid_spec=pltpu.PrefetchScalarGridSpec(
            num_scalar_prefetch=0,
            grid=(B_pad // tm,),
            in_specs=in_specs,
            out_specs=out_spec,
        ),
        compiler_params=pltpu.CompilerParams(
            dimension_semantics=("parallel",),
            vmem_limit_bytes=32 * 1024 * 1024,
        ),
    )(x_p, *flat_params)

    return out_padded[:B, :DIMS[-1]]


def init_params(key):
    """Deterministic init: shapes match torch.nn.Linear, stored transposed as (in, out)."""
    params = []
    for li in range(5):
        fan_in, fan_out = DIMS[li], DIMS[li + 1]
        key, wk, bk = jax.random.split(key, 3)
        bound = 1.0 / jnp.sqrt(fan_in)
        w = jax.random.uniform(wk, (fan_in, fan_out), jnp.float32, -bound, bound)
        b = jax.random.uniform(bk, (1, fan_out), jnp.float32, -bound, bound)
        params.append((w, b))
    return params


def reference_forward(x, params):
    """Pure-JAX reference mirroring the kernel's bf16 quantization of the matmul
    operands (accumulation, bias and ReLU in f32), so only summation order differs."""
    h = x.reshape(-1, DIMS[0]).astype(jnp.bfloat16).astype(jnp.float32)
    for li, (w, b) in enumerate(params):
        wq = w.astype(jnp.bfloat16).astype(jnp.float32)
        h = h @ wq + b
        if li < 4:
            h = jnp.maximum(h, 0.0).astype(jnp.bfloat16).astype(jnp.float32)
    return h


if __name__ == "__main__":
    key = jax.random.PRNGKey(0)
    pkey, xkey = jax.random.split(key)
    params = init_params(pkey)

    # Small MNIST-like batch in NCHW; B=20 deliberately non-multiple-of-8 to
    # exercise the batch-padding path.
    B = 20
    x = jax.random.normal(xkey, (B, 1, 28, 28), jnp.float32)

    out = mnist_model_forward(x, params)
    out = jax.block_until_ready(out)

    ref = reference_forward(x, params)
    assert out.shape == (B, 10), out.shape
    assert jnp.allclose(out, ref, atol=1e-2, rtol=1e-2), "mismatch vs pure-JAX reference"

    print("KERNEL_OK")
</pallas_src>

<mosaic_0001>
module attributes {stable_mosaic.version = 11 : i64} {
  func.func @mlp_kernel(%arg0: i32, %arg1: memref<24x896xbf16, #tpu.memory_space<vmem>>, %arg2: memref<896x512xbf16, #tpu.memory_space<vmem>>, %arg3: memref<1x512xf32, #tpu.memory_space<vmem>>, %arg4: memref<512x256xbf16, #tpu.memory_space<vmem>>, %arg5: memref<1x256xf32, #tpu.memory_space<vmem>>, %arg6: memref<256x128xbf16, #tpu.memory_space<vmem>>, %arg7: memref<1x128xf32, #tpu.memory_space<vmem>>, %arg8: memref<128x128xbf16, #tpu.memory_space<vmem>>, %arg9: memref<1x128xf32, #tpu.memory_space<vmem>>, %arg10: memref<128x128xbf16, #tpu.memory_space<vmem>>, %arg11: memref<1x128xf32, #tpu.memory_space<vmem>>, %arg12: memref<24x128xf32, #tpu.memory_space<vmem>>) attributes {dimension_semantics = [#tpu.dimension_semantics<parallel>], iteration_bounds = array<i64: 1>, scalar_prefetch = 0 : i64, scratch_operands = 0 : i64, tpu.core_type = #tpu.core_type<tc>, window_params = [{transform_indices = @transform_0, window_bounds = array<i64: 24, 896>}, {pipeline_mode = #tpu.pipeline_mode<synchronous>, transform_indices = @transform_1, window_bounds = array<i64: 896, 512>}, {pipeline_mode = #tpu.pipeline_mode<synchronous>, transform_indices = @transform_2, window_bounds = array<i64: 1, 512>}, {pipeline_mode = #tpu.pipeline_mode<synchronous>, transform_indices = @transform_3, window_bounds = array<i64: 512, 256>}, {pipeline_mode = #tpu.pipeline_mode<synchronous>, transform_indices = @transform_4, window_bounds = array<i64: 1, 256>}, {pipeline_mode = #tpu.pipeline_mode<synchronous>, transform_indices = @transform_5, window_bounds = array<i64: 256, 128>}, {pipeline_mode = #tpu.pipeline_mode<synchronous>, transform_indices = @transform_6, window_bounds = array<i64: 1, 128>}, {pipeline_mode = #tpu.pipeline_mode<synchronous>, transform_indices = @transform_7, window_bounds = array<i64: 128, 128>}, {pipeline_mode = #tpu.pipeline_mode<synchronous>, transform_indices = @transform_8, window_bounds = array<i64: 1, 128>}, {pipeline_mode = #tpu.pipeline_mode<synchronous>, transform_indices = @transform_9, window_bounds = array<i64: 128, 128>}, {pipeline_mode = #tpu.pipeline_mode<synchronous>, transform_indices = @transform_10, window_bounds = array<i64: 1, 128>}, {transform_indices = @transform_11, window_bounds = array<i64: 24, 128>}]} {
    %c0 = arith.constant 0 : index
    %c0_0 = arith.constant 0 : index
    %0 = vector.load %arg1[%c0, %c0_0] : memref<24x896xbf16, #tpu.memory_space<vmem>>, vector<24x896xbf16>
    %c0_1 = arith.constant 0 : index
    %c0_2 = arith.constant 0 : index
    %1 = vector.load %arg2[%c0_1, %c0_2] : memref<896x512xbf16, #tpu.memory_space<vmem>>, vector<896x512xbf16>
    %cst = arith.constant dense<0.000000e+00> : vector<24x512xf32>
    %2 = tpu.matmul %0, %1, %cst {dimension_numbers = #tpu.dot_dimension_numbers<[1], [0], [0], [1], [0, 0, 1, 1], [], []>} : vector<24x896xbf16>, vector<896x512xbf16>, vector<24x512xf32> -> vector<24x512xf32>
    %c0_3 = arith.constant 0 : index
    %c0_4 = arith.constant 0 : index
    %3 = vector.load %arg3[%c0_3, %c0_4] : memref<1x512xf32, #tpu.memory_space<vmem>>, vector<1x512xf32>
    %4 = vector.broadcast %3 : vector<1x512xf32> to vector<24x512xf32>
    %5 = arith.addf %2, %4 : vector<24x512xf32>
    %cst_5 = arith.constant 0.000000e+00 : f32
    %6 = vector.broadcast %cst_5 : f32 to vector<24x512xf32>
    %7 = arith.maximumf %5, %6 : vector<24x512xf32>
    %8 = arith.truncf %7 : vector<24x512xf32> to vector<24x512xbf16>
    %c0_6 = arith.constant 0 : index
    %c0_7 = arith.constant 0 : index
    %9 = vector.load %arg4[%c0_6, %c0_7] : memref<512x256xbf16, #tpu.memory_space<vmem>>, vector<512x256xbf16>
    %cst_8 = arith.constant dense<0.000000e+00> : vector<24x256xf32>
    %10 = tpu.matmul %8, %9, %cst_8 {dimension_numbers = #tpu.dot_dimension_numbers<[1], [0], [0], [1], [0, 0, 1, 1], [], []>} : vector<24x512xbf16>, vector<512x256xbf16>, vector<24x256xf32> -> vector<24x256xf32>
    %c0_9 = arith.constant 0 : index
    %c0_10 = arith.constant 0 : index
    %11 = vector.load %arg5[%c0_9, %c0_10] : memref<1x256xf32, #tpu.memory_space<vmem>>, vector<1x256xf32>
    %12 = vector.broadcast %11 : vector<1x256xf32> to vector<24x256xf32>
    %13 = arith.addf %10, %12 : vector<24x256xf32>
    %cst_11 = arith.constant 0.000000e+00 : f32
    %14 = vector.broadcast %cst_11 : f32 to vector<24x256xf32>
    %15 = arith.maximumf %13, %14 : vector<24x256xf32>
    %16 = arith.truncf %15 : vector<24x256xf32> to vector<24x256xbf16>
    %c0_12 = arith.constant 0 : index
    %c0_13 = arith.constant 0 : index
    %17 = vector.load %arg6[%c0_12, %c0_13] : memref<256x128xbf16, #tpu.memory_space<vmem>>, vector<256x128xbf16>
    %cst_14 = arith.constant dense<0.000000e+00> : vector<24x128xf32>
    %18 = tpu.matmul %16, %17, %cst_14 {dimension_numbers = #tpu.dot_dimension_numbers<[1], [0], [0], [1], [0, 0, 1, 1], [], []>} : vector<24x256xbf16>, vector<256x128xbf16>, vector<24x128xf32> -> vector<24x128xf32>
    %c0_15 = arith.constant 0 : index
    %c0_16 = arith.constant 0 : index
    %19 = vector.load %arg7[%c0_15, %c0_16] : memref<1x128xf32, #tpu.memory_space<vmem>>, vector<1x128xf32>
    %20 = vector.broadcast %19 : vector<1x128xf32> to vector<24x128xf32>
    %21 = arith.addf %18, %20 : vector<24x128xf32>
    %cst_17 = arith.constant 0.000000e+00 : f32
    %22 = vector.broadcast %cst_17 : f32 to vector<24x128xf32>
    %23 = arith.maximumf %21, %22 : vector<24x128xf32>
    %24 = arith.truncf %23 : vector<24x128xf32> to vector<24x128xbf16>
    %c0_18 = arith.constant 0 : index
    %c0_19 = arith.constant 0 : index
    %25 = vector.load %arg8[%c0_18, %c0_19] : memref<128x128xbf16, #tpu.memory_space<vmem>>, vector<128x128xbf16>
    %cst_20 = arith.constant dense<0.000000e+00> : vector<24x128xf32>
    %26 = tpu.matmul %24, %25, %cst_20 {dimension_numbers = #tpu.dot_dimension_numbers<[1], [0], [0], [1], [0, 0, 1, 1], [], []>} : vector<24x128xbf16>, vector<128x128xbf16>, vector<24x128xf32> -> vector<24x128xf32>
    %c0_21 = arith.constant 0 : index
    %c0_22 = arith.constant 0 : index
    %27 = vector.load %arg9[%c0_21, %c0_22] : memref<1x128xf32, #tpu.memory_space<vmem>>, vector<1x128xf32>
    %28 = vector.broadcast %27 : vector<1x128xf32> to vector<24x128xf32>
    %29 = arith.addf %26, %28 : vector<24x128xf32>
    %cst_23 = arith.constant 0.000000e+00 : f32
    %30 = vector.broadcast %cst_23 : f32 to vector<24x128xf32>
    %31 = arith.maximumf %29, %30 : vector<24x128xf32>
    %32 = arith.truncf %31 : vector<24x128xf32> to vector<24x128xbf16>
    %c0_24 = arith.constant 0 : index
    %c0_25 = arith.constant 0 : index
    %33 = vector.load %arg10[%c0_24, %c0_25] : memref<128x128xbf16, #tpu.memory_space<vmem>>, vector<128x128xbf16>
    %cst_26 = arith.constant dense<0.000000e+00> : vector<24x128xf32>
    %34 = tpu.matmul %32, %33, %cst_26 {dimension_numbers = #tpu.dot_dimension_numbers<[1], [0], [0], [1], [0, 0, 1, 1], [], []>} : vector<24x128xbf16>, vector<128x128xbf16>, vector<24x128xf32> -> vector<24x128xf32>
    %c0_27 = arith.constant 0 : index
    %c0_28 = arith.constant 0 : index
    %35 = vector.load %arg11[%c0_27, %c0_28] : memref<1x128xf32, #tpu.memory_space<vmem>>, vector<1x128xf32>
    %36 = vector.broadcast %35 : vector<1x128xf32> to vector<24x128xf32>
    %37 = arith.addf %34, %36 : vector<24x128xf32>
    %c0_29 = arith.constant 0 : index
    %c0_30 = arith.constant 0 : index
    %38 = vector.load %arg12[%c0_29, %c0_30] : memref<24x128xf32, #tpu.memory_space<vmem>>, vector<24x128xf32>
    tpu.vector_store %arg12[%c0_29, %c0_30], %37 {strides = array<i32>} : memref<24x128xf32, #tpu.memory_space<vmem>>, vector<24x128xf32>,
    return
  }
  func.func @transform_0(%arg0: i32) -> (i32, i32) {
    %c0_i32 = arith.constant 0 : i32
    %c0_i32_0 = arith.constant 0 : i32
    return %arg0, %c0_i32 : i32, i32
  }
  func.func @transform_1(%arg0: i32) -> (i32, i32) {
    %c0_i32 = arith.constant 0 : i32
    %c0_i32_0 = arith.constant 0 : i32
    %c0_i32_1 = arith.constant 0 : i32
    return %c0_i32, %c0_i32_0 : i32, i32
  }
  func.func @transform_2(%arg0: i32) -> (i32, i32) {
    %c0_i32 = arith.constant 0 : i32
    %c0_i32_0 = arith.constant 0 : i32
    %c0_i32_1 = arith.constant 0 : i32
    return %c0_i32, %c0_i32_0 : i32, i32
  }
  func.func @transform_3(%arg0: i32) -> (i32, i32) {
    %c0_i32 = arith.constant 0 : i32
    %c0_i32_0 = arith.constant 0 : i32
    %c0_i32_1 = arith.constant 0 : i32
    return %c0_i32, %c0_i32_0 : i32, i32
  }
  func.func @transform_4(%arg0: i32) -> (i32, i32) {
    %c0_i32 = arith.constant 0 : i32
    %c0_i32_0 = arith.constant 0 : i32
    %c0_i32_1 = arith.constant 0 : i32
    return %c0_i32, %c0_i32_0 : i32, i32
  }
  func.func @transform_5(%arg0: i32) -> (i32, i32) {
    %c0_i32 = arith.constant 0 : i32
    %c0_i32_0 = arith.constant 0 : i32
    %c0_i32_1 = arith.constant 0 : i32
    return %c0_i32, %c0_i32_0 : i32, i32
  }
  func.func @transform_6(%arg0: i32) -> (i32, i32) {
    %c0_i32 = arith.constant 0 : i32
    %c0_i32_0 = arith.constant 0 : i32
    %c0_i32_1 = arith.constant 0 : i32
    return %c0_i32, %c0_i32_0 : i32, i32
  }
  func.func @transform_7(%arg0: i32) -> (i32, i32) {
    %c0_i32 = arith.constant 0 : i32
    %c0_i32_0 = arith.constant 0 : i32
    %c0_i32_1 = arith.constant 0 : i32
    return %c0_i32, %c0_i32_0 : i32, i32
  }
  func.func @transform_8(%arg0: i32) -> (i32, i32) {
    %c0_i32 = arith.constant 0 : i32
    %c0_i32_0 = arith.constant 0 : i32
    %c0_i32_1 = arith.constant 0 : i32
    return %c0_i32, %c0_i32_0 : i32, i32
  }
  func.func @transform_9(%arg0: i32) -> (i32, i32) {
    %c0_i32 = arith.constant 0 : i32
    %c0_i32_0 = arith.constant 0 : i32
    %c0_i32_1 = arith.constant 0 : i32
    return %c0_i32, %c0_i32_0 : i32, i32
  }
  func.func @transform_10(%arg0: i32) -> (i32, i32) {
    %c0_i32 = arith.constant 0 : i32
    %c0_i32_0 = arith.constant 0 : i32
    %c0_i32_1 = arith.constant 0 : i32
    return %c0_i32, %c0_i32_0 : i32, i32
  }
  func.func @transform_11(%arg0: i32) -> (i32, i32) {
    %c0_i32 = arith.constant 0 : i32
    %c0_i32_0 = arith.constant 0 : i32
    return %arg0, %c0_i32 : i32, i32
  }
}

</mosaic_0001>

<llo_original>
// kernel: tpu_custom_call.1
$region0: #{tpu_custom_call.1}
  #allocation0 [shape = 'u32[]', space=smem, size = 0x4, offset = 0x4, fixed_abs, tag = 'smem constant byte address 0x4 - core index']
  #allocation1 [shape = 'u32[72,128]{1,0:T(1,128)}', space=vmem, size = 0x9000, scoped, tag = 'internal scratch']
  %s0 = inlined_call_operand.hbm [shape: bf16[24,896], index: 0, kind: input, shape index: {}]
  %s1 = inlined_call_operand.hbm [shape: bf16[896,512], index: 1, kind: input, shape index: {}]
  %s2 = inlined_call_operand.hbm [shape: f32[1,512], index: 2, kind: input, shape index: {}]
  %s3 = inlined_call_operand.hbm [shape: bf16[512,256], index: 3, kind: input, shape index: {}]
  %s4 = inlined_call_operand.vmem [shape: f32[1,256], index: 4, kind: input, shape index: {}]
  %s5 = inlined_call_operand.hbm [shape: bf16[256,128], index: 5, kind: input, shape index: {}]
  %s6 = inlined_call_operand.vmem [shape: f32[1,128], index: 6, kind: input, shape index: {}]
  %s7 = inlined_call_operand.hbm [shape: bf16[128,128], index: 7, kind: input, shape index: {}]
  %s8 = inlined_call_operand.vmem [shape: f32[1,128], index: 8, kind: input, shape index: {}]
  %s9 = inlined_call_operand.hbm [shape: bf16[128,128], index: 9, kind: input, shape index: {}]
  %s10 = inlined_call_operand.vmem [shape: f32[1,128], index: 10, kind: input, shape index: {}]
  %s11 = inlined_call_operand.hbm [shape: f32[24,128], index: 11, kind: output, shape index: {}]
  %s12 = sld [smem:[#allocation0]]
  $region82: #{tpu_custom_call.1} parent=0
    _
  %s14 = ssub.s32 1, %s12
  %s15 = scalar_select 0, %s14, %s12
  $region1: #{tpu_custom_call.1} parent=0
    #allocation2 [shape = 'u8[43008]{0}', space=vmem, size = 0xa800, scoped, tag = 'input window, operand 0, single buffered']
    #allocation3 [shape = 's32[1]{0}', space=sflag, size = 0x4, scoped, tag = 'scoped memory for tpu_custom_call.1']
    #allocation4 [shape = 's32[1]{0}', space=sflag, size = 0x4, scoped, tag = 'scoped memory for tpu_custom_call.1']
    #allocation5 [shape = 'u8[917504]{0}', space=vmem, size = 0xe0000, scoped, tag = 'input window, operand 1, single buffered']
    #allocation6 [shape = 's32[1]{0}', space=sflag, size = 0x4, scoped, tag = 'scoped memory for tpu_custom_call.1']
    #allocation7 [shape = 'u8[2048]{0}', space=vmem, size = 0x800, scoped, tag = 'input window, operand 2, single buffered']
    #allocation8 [shape = 'u8[262144]{0}', space=vmem, size = 0x40000, scoped, tag = 'input window, operand 3, single buffered']
    #allocation9 [shape = 's32[1]{0}', space=sflag, size = 0x4, scoped, tag = 'scoped memory for tpu_custom_call.1']
    #allocation10 [shape = 'u8[65536]{0}', space=vmem, size = 0x10000, scoped, tag = 'input window, operand 5, single buffered']
    #allocation11 [shape = 'u8[32768]{0}', space=vmem, size = 0x8000, scoped, tag = 'input window, operand 7, single buffered']
    #allocation12 [shape = 's32[1]{0}', space=sflag, size = 0x4, scoped, tag = 'scoped memory for tpu_custom_call.1']
    #allocation13 [shape = 'u8[32768]{0}', space=vmem, size = 0x8000, scoped, tag = 'input window, operand 9, single buffered']
    #allocation14 [shape = 'u8[12288]{0}', space=vmem, size = 0x3000, scoped, tag = 'output window, operand 0, single buffered']
    %16 = vsyncpa [#allocation3], 0
    %17 = vsyncpa [#allocation6], 0
    %18 = vsyncpa [#allocation9], 0
    %19 = vsyncpa [#allocation12], 0
    %20 = vsyncpa [#allocation4], 0
    // Predicated region
    $region2: #{tpu_custom_call.1} parent=1 // pred_check
      _
    $region3: #{tpu_custom_call.1} parent=1 // pred_check_branch
      %22 = sbr.rel (0) target = $region5
    $region4: #{tpu_custom_call.1} parent=1 // pred_region
      %24 = vsyncadd [#allocation3], 0
      %s25 = sshll.u32 %s0, 4
      %s26 = int_to_ptr.hbm [resolvable:$true] %s25
      %s27 = sshll.u32 [#allocation2], 4
      %s28 = int_to_ptr.vmem [resolvable:$true] %s27
      %33 = dma.hbm_to_vmem [thread:$0]  %s26, 1344, %s28, [#allocation3], 448, 448, 28
    $region5: #{tpu_custom_call.1} parent=1 // pred_fallthru
      _
    // Predicated region
    $region6: #{tpu_custom_call.1} parent=1 // pred_check
      _
    $region7: #{tpu_custom_call.1} parent=1 // pred_check_branch
      %35 = sbr.rel (0) target = $region9
    $region8: #{tpu_custom_call.1} parent=1 // pred_region
      %37 = vsyncadd [#allocation6], 0
      %s38 = sshll.u32 %s1, 4
      %s39 = int_to_ptr.hbm [resolvable:$true] %s38
      %s40 = sshll.u32 [#allocation5], 4
      %s41 = int_to_ptr.vmem [resolvable:$true] %s40
      %46 = dma.hbm_to_vmem [thread:$0]  %s39, 28672, %s41, [#allocation6], 256, 256, 16
    $region9: #{tpu_custom_call.1} parent=1 // pred_fallthru
      _
    // Predicated region
    $region10: #{tpu_custom_call.1} parent=1 // pred_check
      _
    $region11: #{tpu_custom_call.1} parent=1 // pred_check_branch
      %48 = sbr.rel (0) target = $region13
    $region12: #{tpu_custom_call.1} parent=1 // pred_region
      %50 = vsyncadd [#allocation6], 0
      %s52 = sshll.u32 %s2, 4
      %s53 = int_to_ptr.hbm [resolvable:$true] %s52
      %s54 = sshll.u32 [#allocation7], 4
      %s55 = int_to_ptr.vmem [resolvable:$true] %s54
      %57 = dma.hbm_to_vmem [thread:$0]  %s53, 64, %s55, [#allocation6]
    $region13: #{tpu_custom_call.1} parent=1 // pred_fallthru
      _
    // Predicated region
    $region14: #{tpu_custom_call.1} parent=1 // pred_check
      _
    $region15: #{tpu_custom_call.1} parent=1 // pred_check_branch
      %59 = sbr.rel (0) target = $region17
    $region16: #{tpu_custom_call.1} parent=1 // pred_region
      %61 = vsyncadd [#allocation9], 0
      %s62 = sshll.u32 %s3, 4
      %s63 = int_to_ptr.hbm [resolvable:$true] %s62
      %s64 = sshll.u32 [#allocation8], 4
      %s65 = int_to_ptr.vmem [resolvable:$true] %s64
      %70 = dma.hbm_to_vmem [thread:$0]  %s63, 8192, %s65, [#allocation9], 128, 128, 8
    $region17: #{tpu_custom_call.1} parent=1 // pred_fallthru
      _
    // Predicated region
    $region18: #{tpu_custom_call.1} parent=1 // pred_check
      _
    $region19: #{tpu_custom_call.1} parent=1 // pred_check_branch
      %72 = sbr.rel (0) target = $region21
    $region20: #{tpu_custom_call.1} parent=1 // pred_region
      _
    $region21: #{tpu_custom_call.1} parent=1 // pred_fallthru
      _
    // Predicated region
    $region22: #{tpu_custom_call.1} parent=1 // pred_check
      _
    $region23: #{tpu_custom_call.1} parent=1 // pred_check_branch
      %74 = sbr.rel (0) target = $region25
    $region24: #{tpu_custom_call.1} parent=1 // pred_region
      %76 = vsyncadd [#allocation9], 0
      %s77 = sshll.u32 %s5, 4
      %s78 = int_to_ptr.hbm [resolvable:$true] %s77
      %s79 = sshll.u32 [#allocation10], 4
      %s80 = int_to_ptr.vmem [resolvable:$true] %s79
      %85 = dma.hbm_to_vmem [thread:$0]  %s78, 2048, %s80, [#allocation9], 64, 64, 4
    $region25: #{tpu_custom_call.1} parent=1 // pred_fallthru
      _
    // Predicated region
    $region26: #{tpu_custom_call.1} parent=1 // pred_check
      _
    $region27: #{tpu_custom_call.1} parent=1 // pred_check_branch
      %87 = sbr.rel (0) target = $region29
    $region28: #{tpu_custom_call.1} parent=1 // pred_region
      _
    $region29: #{tpu_custom_call.1} parent=1 // pred_fallthru
      _
    // Predicated region
    $region30: #{tpu_custom_call.1} parent=1 // pred_check
      _
    $region31: #{tpu_custom_call.1} parent=1 // pred_check_branch
      %89 = sbr.rel (0) target = $region33
    $region32: #{tpu_custom_call.1} parent=1 // pred_region
      %91 = vsyncadd [#allocation12], 0
      %s92 = sshll.u32 %s7, 4
      %s93 = int_to_ptr.hbm [resolvable:$true] %s92
      %s94 = sshll.u32 [#allocation11], 4
      %s95 = int_to_ptr.vmem [resolvable:$true] %s94
      %100 = dma.hbm_to_vmem [thread:$0]  %s93, 1024, %s95, [#allocation12], 64, 64, 4
    $region33: #{tpu_custom_call.1} parent=1 // pred_fallthru
      _
    // Predicated region
    $region34: #{tpu_custom_call.1} parent=1 // pred_check
      _
    $region35: #{tpu_custom_call.1} parent=1 // pred_check_branch
      %102 = sbr.rel (0) target = $region37
    $region36: #{tpu_custom_call.1} parent=1 // pred_region
      _
    $region37: #{tpu_custom_call.1} parent=1 // pred_fallthru
      _
    // Predicated region
    $region38: #{tpu_custom_call.1} parent=1 // pred_check
      _
    $region39: #{tpu_custom_call.1} parent=1 // pred_check_branch
      %104 = sbr.rel (0) target = $region41
    $region40: #{tpu_custom_call.1} parent=1 // pred_region
      %106 = vsyncadd [#allocation12], 0
      %s107 = sshll.u32 %s9, 4
      %s108 = int_to_ptr.hbm [resolvable:$true] %s107
      %s109 = sshll.u32 [#allocation13], 4
      %s110 = int_to_ptr.vmem [resolvable:$true] %s109
      %115 = dma.hbm_to_vmem [thread:$0]  %s108, 1024, %s110, [#allocation12], 64, 64, 4
    $region41: #{tpu_custom_call.1} parent=1 // pred_fallthru
      _
    // Predicated region
    $region42: #{tpu_custom_call.1} parent=1 // pred_check
      _
    $region43: #{tpu_custom_call.1} parent=1 // pred_check_branch
      %117 = sbr.rel (0) target = $region45
    $region44: #{tpu_custom_call.1} parent=1 // pred_region
      _
    $region45: #{tpu_custom_call.1} parent=1 // pred_fallthru
      _
    // Predicated region
    $region46: #{tpu_custom_call.1} parent=1 // pred_check
      _
    $region47: #{tpu_custom_call.1} parent=1 // pred_check_branch
      %119 = sbr.rel (0) target = $region49
    $region48: #{tpu_custom_call.1} parent=1 // pred_region
      %121 = dma.done [#allocation3], 1344
    $region49: #{tpu_custom_call.1} parent=1 // pred_fallthru
      _
    // Predicated region
    $region50: #{tpu_custom_call.1} parent=1 // pred_check
      _
    $region51: #{tpu_custom_call.1} parent=1 // pred_check_branch
      %123 = sbr.rel (0) target = $region53
    $region52: #{tpu_custom_call.1} parent=1 // pred_region
      %125 = dma.done [#allocation6], 28672
    $region53: #{tpu_custom_call.1} parent=1 // pred_fallthru
      _
    // Predicated region
    $region54: #{tpu_custom_call.1} parent=1 // pred_check
      _
    $region55: #{tpu_custom_call.1} parent=1 // pred_check_branch
      %127 = sbr.rel (0) target = $region57
    $region56: #{tpu_custom_call.1} parent=1 // pred_region
      %129 = dma.done [#allocation6], 64
    $region57: #{tpu_custom_call.1} parent=1 // pred_fallthru
      _
    // Predicated region
    $region58: #{tpu_custom_call.1} parent=1 // pred_check
      _
    $region59: #{tpu_custom_call.1} parent=1 // pred_check_branch
      %131 = sbr.rel (0) target = $region61
    $region60: #{tpu_custom_call.1} parent=1 // pred_region
      %133 = dma.done [#allocation9], 8192
    $region61: #{tpu_custom_call.1} parent=1 // pred_fallthru
      _
    // Predicated region
    $region62: #{tpu_custom_call.1} parent=1 // pred_check
      _
    $region63: #{tpu_custom_call.1} parent=1 // pred_check_branch
      %135 = sbr.rel (0) target = $region65
    $region64: #{tpu_custom_call.1} parent=1 // pred_region
      %137 = dma.done [#allocation9], 2048
    $region65: #{tpu_custom_call.1} parent=1 // pred_fallthru
      _
    // Predicated region
    $region66: #{tpu_custom_call.1} parent=1 // pred_check
      _
    $region67: #{tpu_custom_call.1} parent=1 // pred_check_branch
      %139 = sbr.rel (0) target = $region69
    $region68: #{tpu_custom_call.1} parent=1 // pred_region
      %141 = dma.done [#allocation12], 1024
    $region69: #{tpu_custom_call.1} parent=1 // pred_fallthru
      _
    // Predicated region
    $region70: #{tpu_custom_call.1} parent=1 // pred_check
      _
    $region71: #{tpu_custom_call.1} parent=1 // pred_check_branch
      %143 = sbr.rel (0) target = $region73
    $region72: #{tpu_custom_call.1} parent=1 // pred_region
      %145 = dma.done [#allocation12], 1024
    $region73: #{tpu_custom_call.1} parent=1 // pred_fallthru
      _
    %v146 = vld [vmem:[#allocation2] sm:$0xff]
    %v147 = vld [vmem:[#allocation2 + $0x8] sm:$0xff]
    %v148 = vld [vmem:[#allocation2 + $0x10] sm:$0xff]
    %v149 = vld [vmem:[#allocation2 + $0x18] sm:$0xf]
    %v150 = vld [vmem:[#allocation2 + $0x1c] sm:$0xff]
    %v151 = vld [vmem:[#allocation2 + $0x24] sm:$0xff]
    %v152 = vld [vmem:[#allocation2 + $0x2c] sm:$0xff]
    %v153 = vld [vmem:[#allocation2 + $0x34] sm:$0xf]
    %v154 = vld [vmem:[#allocation2 + $0x38] sm:$0xff]
    %v155 = vld [vmem:[#allocation2 + $0x40] sm:$0xff]
    %v156 = vld [vmem:[#allocation2 + $0x48] sm:$0xff]
    %v157 = vld [vmem:[#allocation2 + $0x50] sm:$0xf]
    %v158 = vld [vmem:[#allocation5] sm:$0xff]
    %v159 = vld [vmem:[#allocation5 + $0x8] sm:$0xff]
    %v160 = vld [vmem:[#allocation5 + $0x10] sm:$0xff]
    %v161 = vld [vmem:[#allocation5 + $0x18] sm:$0xff]
    %v162 = vld [vmem:[#allocation5 + $0x20] sm:$0xff]
    %v163 = vld [vmem:[#allocation5 + $0x28] sm:$0xff]
    %v164 = vld [vmem:[#allocation5 + $0x30] sm:$0xff]
    %v165 = vld [vmem:[#allocation5 + $0x38] sm:$0xff]
    %v166 = vld [vmem:[#allocation5 + $0x40] sm:$0xff]
    %v167 = vld [vmem:[#allocation5 + $0x48] sm:$0xff]
    %v168 = vld [vmem:[#allocation5 + $0x50] sm:$0xff]
    %v169 = vld [vmem:[#allocation5 + $0x58] sm:$0xff]
    %v170 = vld [vmem:[#allocation5 + $0x60] sm:$0xff]
    %v171 = vld [vmem:[#allocation5 + $0x68] sm:$0xff]
    %v172 = vld [vmem:[#allocation5 + $0x70] sm:$0xff]
    %v173 = vld [vmem:[#allocation5 + $0x78] sm:$0xff]
    %v174 = vld [vmem:[#allocation5 + $0x80] sm:$0xff]
    %v175 = vld [vmem:[#allocation5 + $0x88] sm:$0xff]
    %v176 = vld [vmem:[#allocation5 + $0x90] sm:$0xff]
    %v177 = vld [vmem:[#allocation5 + $0x98] sm:$0xff]
    %v178 = vld [vmem:[#allocation5 + $0xa0] sm:$0xff]
    %v179 = vld [vmem:[#allocation5 + $0xa8] sm:$0xff]
    %v180 = vld [vmem:[#allocation5 + $0xb0] sm:$0xff]
    %v181 = vld [vmem:[#allocation5 + $0xb8] sm:$0xff]
    %v182 = vld [vmem:[#allocation5 + $0xc0] sm:$0xff]
    %v183 = vld [vmem:[#allocation5 + $0xc8] sm:$0xff]
    %v184 = vld [vmem:[#allocation5 + $0xd0] sm:$0xff]
    %v185 = vld [vmem:[#allocation5 + $0xd8] sm:$0xff]
    %v186 = vld [vmem:[#allocation5 + $0xe0] sm:$0xff]
    %v187 = vld [vmem:[#allocation5 + $0xe8] sm:$0xff]
    %v188 = vld [vmem:[#allocation5 + $0xf0] sm:$0xff]
    %v189 = vld [vmem:[#allocation5 + $0xf8] sm:$0xff]
    %v190 = vld [vmem:[#allocation5 + $0x100] sm:$0xff]
    %v191 = vld [vmem:[#allocation5 + $0x108] sm:$0xff]
    %v192 = vld [vmem:[#allocation5 + $0x110] sm:$0xff]
    %v193 = vld [vmem:[#allocation5 + $0x118] sm:$0xff]
    %v194 = vld [vmem:[#allocation5 + $0x120] sm:$0xff]
    %v195 = vld [vmem:[#allocation5 + $0x128] sm:$0xff]
    %v196 = vld [vmem:[#allocation5 + $0x130] sm:$0xff]
    %v197 = vld [vmem:[#allocation5 + $0x138] sm:$0xff]
    %v198 = vld [vmem:[#allocation5 + $0x140] sm:$0xff]
    %v199 = vld [vmem:[#allocation5 + $0x148] sm:$0xff]
    %v200 = vld [vmem:[#allocation5 + $0x150] sm:$0xff]
    %v201 = vld [vmem:[#allocation5 + $0x158] sm:$0xff]
    %v202 = vld [vmem:[#allocation5 + $0x160] sm:$0xff]
    %v203 = vld [vmem:[#allocation5 + $0x168] sm:$0xff]
    %v204 = vld [vmem:[#allocation5 + $0x170] sm:$0xff]
    %v205 = vld [vmem:[#allocation5 + $0x178] sm:$0xff]
    %v206 = vld [vmem:[#allocation5 + $0x180] sm:$0xff]
    %v207 = vld [vmem:[#allocation5 + $0x188] sm:$0xff]
    %v208 = vld [vmem:[#allocation5 + $0x190] sm:$0xff]
    %v209 = vld [vmem:[#allocation5 + $0x198] sm:$0xff]
    %v210 = vld [vmem:[#allocation5 + $0x1a0] sm:$0xff]
    %v211 = vld [vmem:[#allocation5 + $0x1a8] sm:$0xff]
    %v212 = vld [vmem:[#allocation5 + $0x1b0] sm:$0xff]
    %v213 = vld [vmem:[#allocation5 + $0x1b8] sm:$0xff]
    %v214 = vld [vmem:[#allocation5 + $0x1c0] sm:$0xff]
    %v215 = vld [vmem:[#allocation5 + $0x1c8] sm:$0xff]
    %v216 = vld [vmem:[#allocation5 + $0x1d0] sm:$0xff]
    %v217 = vld [vmem:[#allocation5 + $0x1d8] sm:$0xff]
    %v218 = vld [vmem:[#allocation5 + $0x1e0] sm:$0xff]
    %v219 = vld [vmem:[#allocation5 + $0x1e8] sm:$0xff]
    %v220 = vld [vmem:[#allocation5 + $0x1f0] sm:$0xff]
    %v221 = vld [vmem:[#allocation5 + $0x1f8] sm:$0xff]
    %v222 = vld [vmem:[#allocation5 + $0x200] sm:$0xff]
    %v223 = vld [vmem:[#allocation5 + $0x208] sm:$0xff]
    %v224 = vld [vmem:[#allocation5 + $0x210] sm:$0xff]
    %v225 = vld [vmem:[#allocation5 + $0x218] sm:$0xff]
    %v226 = vld [vmem:[#allocation5 + $0x220] sm:$0xff]
    %v227 = vld [vmem:[#allocation5 + $0x228] sm:$0xff]
    %v228 = vld [vmem:[#allocation5 + $0x230] sm:$0xff]
    %v229 = vld [vmem:[#allocation5 + $0x238] sm:$0xff]
    %v230 = vld [vmem:[#allocation5 + $0x240] sm:$0xff]
    %v231 = vld [vmem:[#allocation5 + $0x248] sm:$0xff]
    %v232 = vld [vmem:[#allocation5 + $0x250] sm:$0xff]
    %v233 = vld [vmem:[#allocation5 + $0x258] sm:$0xff]
    %v234 = vld [vmem:[#allocation5 + $0x260] sm:$0xff]
    %v235 = vld [vmem:[#allocation5 + $0x268] sm:$0xff]
    %v236 = vld [vmem:[#allocation5 + $0x270] sm:$0xff]
    %v237 = vld [vmem:[#allocation5 + $0x278] sm:$0xff]
    %v238 = vld [vmem:[#allocation5 + $0x280] sm:$0xff]
    %v239 = vld [vmem:[#allocation5 + $0x288] sm:$0xff]
    %v240 = vld [vmem:[#allocation5 + $0x290] sm:$0xff]
    %v241 = vld [vmem:[#allocation5 + $0x298] sm:$0xff]
    %v242 = vld [vmem:[#allocation5 + $0x2a0] sm:$0xff]
    %v243 = vld [vmem:[#allocation5 + $0x2a8] sm:$0xff]
    %v244 = vld [vmem:[#allocation5 + $0x2b0] sm:$0xff]
    %v245 = vld [vmem:[#allocation5 + $0x2b8] sm:$0xff]
    %v246 = vld [vmem:[#allocation5 + $0x2c0] sm:$0xff]
    %v247 = vld [vmem:[#allocation5 + $0x2c8] sm:$0xff]
    %v248 = vld [vmem:[#allocation5 + $0x2d0] sm:$0xff]
    %v249 = vld [vmem:[#allocation5 + $0x2d8] sm:$0xff]
    %v250 = vld [vmem:[#allocation5 + $0x2e0] sm:$0xff]
    %v251 = vld [vmem:[#allocation5 + $0x2e8] sm:$0xff]
    %v252 = vld [vmem:[#allocation5 + $0x2f0] sm:$0xff]
    %v253 = vld [vmem:[#allocation5 + $0x2f8] sm:$0xff]
    %v254 = vld [vmem:[#allocation5 + $0x300] sm:$0xff]
    %v255 = vld [vmem:[#allocation5 + $0x308] sm:$0xff]
    %v256 = vld [vmem:[#allocation5 + $0x310] sm:$0xff]
    %v257 = vld [vmem:[#allocation5 + $0x318] sm:$0xff]
    %v258 = vld [vmem:[#allocation5 + $0x320] sm:$0xff]
    %v259 = vld [vmem:[#allocation5 + $0x328] sm:$0xff]
    %v260 = vld [vmem:[#allocation5 + $0x330] sm:$0xff]
    %v261 = vld [vmem:[#allocation5 + $0x338] sm:$0xff]
    %v262 = vld [vmem:[#allocation5 + $0x340] sm:$0xff]
    %v263 = vld [vmem:[#allocation5 + $0x348] sm:$0xff]
    %v264 = vld [vmem:[#allocation5 + $0x350] sm:$0xff]
    %v265 = vld [vmem:[#allocation5 + $0x358] sm:$0xff]
    %v266 = vld [vmem:[#allocation5 + $0x360] sm:$0xff]
    %v267 = vld [vmem:[#allocation5 + $0x368] sm:$0xff]
    %v268 = vld [vmem:[#allocation5 + $0x370] sm:$0xff]
    %v269 = vld [vmem:[#allocation5 + $0x378] sm:$0xff]
    %v270 = vld [vmem:[#allocation5 + $0x380] sm:$0xff]
    %v271 = vld [vmem:[#allocation5 + $0x388] sm:$0xff]
    %v272 = vld [vmem:[#allocation5 + $0x390] sm:$0xff]
    %v273 = vld [vmem:[#allocation5 + $0x398] sm:$0xff]
    %v274 = vld [vmem:[#allocation5 + $0x3a0] sm:$0xff]
    %v275 = vld [vmem:[#allocation5 + $0x3a8] sm:$0xff]
    %v276 = vld [vmem:[#allocation5 + $0x3b0] sm:$0xff]
    %v277 = vld [vmem:[#allocation5 + $0x3b8] sm:$0xff]
    %v278 = vld [vmem:[#allocation5 + $0x3c0] sm:$0xff]
    %v279 = vld [vmem:[#allocation5 + $0x3c8] sm:$0xff]
    %v280 = vld [vmem:[#allocation5 + $0x3d0] sm:$0xff]
    %v281 = vld [vmem:[#allocation5 + $0x3d8] sm:$0xff]
    %v282 = vld [vmem:[#allocation5 + $0x3e0] sm:$0xff]
    %v283 = vld [vmem:[#allocation5 + $0x3e8] sm:$0xff]
    %v284 = vld [vmem:[#allocation5 + $0x3f0] sm:$0xff]
    %v285 = vld [vmem:[#allocation5 + $0x3f8] sm:$0xff]
    %v286 = vld [vmem:[#allocation5 + $0x400] sm:$0xff]
    %v287 = vld [vmem:[#allocation5 + $0x408] sm:$0xff]
    %v288 = vld [vmem:[#allocation5 + $0x410] sm:$0xff]
    %v289 = vld [vmem:[#allocation5 + $0x418] sm:$0xff]
    %v290 = vld [vmem:[#allocation5 + $0x420] sm:$0xff]
    %v291 = vld [vmem:[#allocation5 + $0x428] sm:$0xff]
    %v292 = vld [vmem:[#allocation5 + $0x430] sm:$0xff]
    %v293 = vld [vmem:[#allocation5 + $0x438] sm:$0xff]
    %v294 = vld [vmem:[#allocation5 + $0x440] sm:$0xff]
    %v295 = vld [vmem:[#allocation5 + $0x448] sm:$0xff]
    %v296 = vld [vmem:[#allocation5 + $0x450] sm:$0xff]
    %v297 = vld [vmem:[#allocation5 + $0x458] sm:$0xff]
    %v298 = vld [vmem:[#allocation5 + $0x460] sm:$0xff]
    %v299 = vld [vmem:[#allocation5 + $0x468] sm:$0xff]
    %v300 = vld [vmem:[#allocation5 + $0x470] sm:$0xff]
    %v301 = vld [vmem:[#allocation5 + $0x478] sm:$0xff]
    %v302 = vld [vmem:[#allocation5 + $0x480] sm:$0xff]
    %v303 = vld [vmem:[#allocation5 + $0x488] sm:$0xff]
    %v304 = vld [vmem:[#allocation5 + $0x490] sm:$0xff]
    %v305 = vld [vmem:[#allocation5 + $0x498] sm:$0xff]
    %v306 = vld [vmem:[#allocation5 + $0x4a0] sm:$0xff]
    %v307 = vld [vmem:[#allocation5 + $0x4a8] sm:$0xff]
    %v308 = vld [vmem:[#allocation5 + $0x4b0] sm:$0xff]
    %v309 = vld [vmem:[#allocation5 + $0x4b8] sm:$0xff]
    %v310 = vld [vmem:[#allocation5 + $0x4c0] sm:$0xff]
    %v311 = vld [vmem:[#allocation5 + $0x4c8] sm:$0xff]
    %v312 = vld [vmem:[#allocation5 + $0x4d0] sm:$0xff]
    %v313 = vld [vmem:[#allocation5 + $0x4d8] sm:$0xff]
    %v314 = vld [vmem:[#allocation5 + $0x4e0] sm:$0xff]
    %v315 = vld [vmem:[#allocation5 + $0x4e8] sm:$0xff]
    %v316 = vld [vmem:[#allocation5 + $0x4f0] sm:$0xff]
    %v317 = vld [vmem:[#allocation5 + $0x4f8] sm:$0xff]
    %v318 = vld [vmem:[#allocation5 + $0x500] sm:$0xff]
    %v319 = vld [vmem:[#allocation5 + $0x508] sm:$0xff]
    %v320 = vld [vmem:[#allocation5 + $0x510] sm:$0xff]
    %v321 = vld [vmem:[#allocation5 + $0x518] sm:$0xff]
    %v322 = vld [vmem:[#allocation5 + $0x520] sm:$0xff]
    %v323 = vld [vmem:[#allocation5 + $0x528] sm:$0xff]
    %v324 = vld [vmem:[#allocation5 + $0x530] sm:$0xff]
    %v325 = vld [vmem:[#allocation5 + $0x538] sm:$0xff]
    %v326 = vld [vmem:[#allocation5 + $0x540] sm:$0xff]
    %v327 = vld [vmem:[#allocation5 + $0x548] sm:$0xff]
    %v328 = vld [vmem:[#allocation5 + $0x550] sm:$0xff]
    %v329 = vld [vmem:[#allocation5 + $0x558] sm:$0xff]
    %v330 = vld [vmem:[#allocation5 + $0x560] sm:$0xff]
    %v331 = vld [vmem:[#allocation5 + $0x568] sm:$0xff]
    %v332 = vld [vmem:[#allocation5 + $0x570] sm:$0xff]
    %v333 = vld [vmem:[#allocation5 + $0x578] sm:$0xff]
    %v334 = vld [vmem:[#allocation5 + $0x580] sm:$0xff]
    %v335 = vld [vmem:[#allocation5 + $0x588] sm:$0xff]
    %v336 = vld [vmem:[#allocation5 + $0x590] sm:$0xff]
    %v337 = vld [vmem:[#allocation5 + $0x598] sm:$0xff]
    %v338 = vld [vmem:[#allocation5 + $0x5a0] sm:$0xff]
    %v339 = vld [vmem:[#allocation5 + $0x5a8] sm:$0xff]
    %v340 = vld [vmem:[#allocation5 + $0x5b0] sm:$0xff]
    %v341 = vld [vmem:[#allocation5 + $0x5b8] sm:$0xff]
    %v342 = vld [vmem:[#allocation5 + $0x5c0] sm:$0xff]
    %v343 = vld [vmem:[#allocation5 + $0x5c8] sm:$0xff]
    %v344 = vld [vmem:[#allocation5 + $0x5d0] sm:$0xff]
    %v345 = vld [vmem:[#allocation5 + $0x5d8] sm:$0xff]
    %v346 = vld [vmem:[#allocation5 + $0x5e0] sm:$0xff]
    %v347 = vld [vmem:[#allocation5 + $0x5e8] sm:$0xff]
    %v348 = vld [vmem:[#allocation5 + $0x5f0] sm:$0xff]
    %v349 = vld [vmem:[#allocation5 + $0x5f8] sm:$0xff]
    %v350 = vld [vmem:[#allocation5 + $0x600] sm:$0xff]
    %v351 = vld [vmem:[#allocation5 + $0x608] sm:$0xff]
    %v352 = vld [vmem:[#allocation5 + $0x610] sm:$0xff]
    %v353 = vld [vmem:[#allocation5 + $0x618] sm:$0xff]
    %v354 = vld [vmem:[#allocation5 + $0x620] sm:$0xff]
    %v355 = vld [vmem:[#allocation5 + $0x628] sm:$0xff]
    %v356 = vld [vmem:[#allocation5 + $0x630] sm:$0xff]
    %v357 = vld [vmem:[#allocation5 + $0x638] sm:$0xff]
    %v358 = vld [vmem:[#allocation5 + $0x640] sm:$0xff]
    %v359 = vld [vmem:[#allocation5 + $0x648] sm:$0xff]
    %v360 = vld [vmem:[#allocation5 + $0x650] sm:$0xff]
    %v361 = vld [vmem:[#allocation5 + $0x658] sm:$0xff]
    %v362 = vld [vmem:[#allocation5 + $0x660] sm:$0xff]
    %v363 = vld [vmem:[#allocation5 + $0x668] sm:$0xff]
    %v364 = vld [vmem:[#allocation5 + $0x670] sm:$0xff]
    %v365 = vld [vmem:[#allocation5 + $0x678] sm:$0xff]
    %v366 = vld [vmem:[#allocation5 + $0x680] sm:$0xff]
    %v367 = vld [vmem:[#allocation5 + $0x688] sm:$0xff]
    %v368 = vld [vmem:[#allocation5 + $0x690] sm:$0xff]
    %v369 = vld [vmem:[#allocation5 + $0x698] sm:$0xff]
    %v370 = vld [vmem:[#allocation5 + $0x6a0] sm:$0xff]
    %v371 = vld [vmem:[#allocation5 + $0x6a8] sm:$0xff]
    %v372 = vld [vmem:[#allocation5 + $0x6b0] sm:$0xff]
    %v373 = vld [vmem:[#allocation5 + $0x6b8] sm:$0xff]
    %v374 = vld [vmem:[#allocation5 + $0x6c0] sm:$0xff]
    %v375 = vld [vmem:[#allocation5 + $0x6c8] sm:$0xff]
    %v376 = vld [vmem:[#allocation5 + $0x6d0] sm:$0xff]
    %v377 = vld [vmem:[#allocation5 + $0x6d8] sm:$0xff]
    %v378 = vld [vmem:[#allocation5 + $0x6e0] sm:$0xff]
    %v379 = vld [vmem:[#allocation5 + $0x6e8] sm:$0xff]
    %v380 = vld [vmem:[#allocation5 + $0x6f0] sm:$0xff]
    %v381 = vld [vmem:[#allocation5 + $0x6f8] sm:$0xff]
    %v382 = vld [vmem:[#allocation7] sm:$0xf]
    %v384 = vperm.slane %v382, 0
    %v385 = vperm.slane %v382, 1
    %v386 = vperm.slane %v382, 2
    %v387 = vperm.slane %v382, 3
    %v404 = vunpack.c.l.b16 %v146
    %v405 = vunpack.c.h.b16 %v146
    %v406 = vunpack.c.l.b16 %v147
    %v407 = vunpack.c.h.b16 %v147
    %v408 = vunpack.c.l.b16 %v148
    %v409 = vunpack.c.h.b16 %v148
    %v410 = vunpack.c.l.b16 %v149
    %v411 = vunpack.c.l.b16 %v150
    %v412 = vunpack.c.h.b16 %v150
    %v413 = vunpack.c.l.b16 %v151
    %v414 = vunpack.c.h.b16 %v151
    %v415 = vunpack.c.l.b16 %v152
    %v416 = vunpack.c.h.b16 %v152
    %v417 = vunpack.c.l.b16 %v153
    %v418 = vunpack.c.l.b16 %v154
    %v419 = vunpack.c.h.b16 %v154
    %v420 = vunpack.c.l.b16 %v155
    %v421 = vunpack.c.h.b16 %v155
    %v422 = vunpack.c.l.b16 %v156
    %v423 = vunpack.c.h.b16 %v156
    %v424 = vunpack.c.l.b16 %v157
    %v425 = vpack.c.b16 %v411, %v404
    %v426 = vpack.c.b16 %v412, %v405
    %v427 = vpack.c.b16 %v413, %v406
    %v428 = vpack.c.b16 %v414, %v407
    %v429 = vpack.c.b16 %v415, %v408
    %v430 = vpack.c.b16 %v416, %v409
    %v431 = vpack.c.b16 %v417, %v410
    %v432 = vpack.c.b16 %v418, %v418
    %v433 = vpack.c.b16 %v419, %v419
    %v434 = vpack.c.b16 %v420, %v420
    %v435 = vpack.c.b16 %v421, %v421
    %v436 = vpack.c.b16 %v422, %v422
    %v437 = vpack.c.b16 %v423, %v423
    %v438 = vpack.c.b16 %v424, %v424
    %v677 = vunpack.c.l.b16 %v158
    %v678 = vunpack.c.h.b16 %v158
    %v679 = vunpack.c.l.b16 %v159
    %v680 = vunpack.c.h.b16 %v159
    %v681 = vunpack.c.l.b16 %v160
    %v682 = vunpack.c.h.b16 %v160
    %v683 = vunpack.c.l.b16 %v161
    %v684 = vunpack.c.h.b16 %v161
    %v685 = vunpack.c.l.b16 %v162
    %v686 = vunpack.c.h.b16 %v162
    %v687 = vunpack.c.l.b16 %v163
    %v688 = vunpack.c.h.b16 %v163
    %v689 = vunpack.c.l.b16 %v164
    %v690 = vunpack.c.h.b16 %v164
    %v691 = vunpack.c.l.b16 %v165
    %v692 = vunpack.c.h.b16 %v165
    %v693 = vunpack.c.l.b16 %v166
    %v694 = vunpack.c.h.b16 %v166
    %v695 = vunpack.c.l.b16 %v167
    %v696 = vunpack.c.h.b16 %v167
    %v697 = vunpack.c.l.b16 %v168
    %v698 = vunpack.c.h.b16 %v168
    %v699 = vunpack.c.l.b16 %v169
    %v700 = vunpack.c.h.b16 %v169
    %v701 = vunpack.c.l.b16 %v170
    %v702 = vunpack.c.h.b16 %v170
    %v703 = vunpack.c.l.b16 %v171
    %v704 = vunpack.c.h.b16 %v171
    %v705 = vunpack.c.l.b16 %v172
    %v706 = vunpack.c.h.b16 %v172
    %v707 = vunpack.c.l.b16 %v173
    %v708 = vunpack.c.h.b16 %v173
    %v709 = vunpack.c.l.b16 %v174
    %v710 = vunpack.c.h.b16 %v174
    %v711 = vunpack.c.l.b16 %v175
    %v712 = vunpack.c.h.b16 %v175
    %v713 = vunpack.c.l.b16 %v176
    %v714 = vunpack.c.h.b16 %v176
    %v715 = vunpack.c.l.b16 %v177
    %v716 = vunpack.c.h.b16 %v177
    %v717 = vunpack.c.l.b16 %v178
    %v718 = vunpack.c.h.b16 %v178
    %v719 = vunpack.c.l.b16 %v179
    %v720 = vunpack.c.h.b16 %v179
    %v721 = vunpack.c.l.b16 %v180
    %v722 = vunpack.c.h.b16 %v180
    %v723 = vunpack.c.l.b16 %v181
    %v724 = vunpack.c.h.b16 %v181
    %v725 = vunpack.c.l.b16 %v182
    %v726 = vunpack.c.h.b16 %v182
    %v727 = vunpack.c.l.b16 %v183
    %v728 = vunpack.c.h.b16 %v183
    %v729 = vunpack.c.l.b16 %v184
    %v730 = vunpack.c.h.b16 %v184
    %v731 = vunpack.c.l.b16 %v185
    %v732 = vunpack.c.h.b16 %v185
    %v733 = vunpack.c.l.b16 %v186
    %v734 = vunpack.c.h.b16 %v186
    %v735 = vunpack.c.l.b16 %v187
    %v736 = vunpack.c.h.b16 %v187
    %v737 = vunpack.c.l.b16 %v188
    %v738 = vunpack.c.h.b16 %v188
    %v739 = vunpack.c.l.b16 %v189
    %v740 = vunpack.c.h.b16 %v189
    %v741 = vunpack.c.l.b16 %v190
    %v742 = vunpack.c.h.b16 %v190
    %v743 = vunpack.c.l.b16 %v191
    %v744 = vunpack.c.h.b16 %v191
    %v745 = vunpack.c.l.b16 %v192
    %v746 = vunpack.c.h.b16 %v192
    %v747 = vunpack.c.l.b16 %v193
    %v748 = vunpack.c.h.b16 %v193
    %v749 = vunpack.c.l.b16 %v194
    %v750 = vunpack.c.h.b16 %v194
    %v751 = vunpack.c.l.b16 %v195
    %v752 = vunpack.c.h.b16 %v195
    %v753 = vunpack.c.l.b16 %v196
    %v754 = vunpack.c.h.b16 %v196
    %v755 = vunpack.c.l.b16 %v197
    %v756 = vunpack.c.h.b16 %v197
    %v757 = vunpack.c.l.b16 %v198
    %v758 = vunpack.c.h.b16 %v198
    %v759 = vunpack.c.l.b16 %v199
    %v760 = vunpack.c.h.b16 %v199
    %v761 = vunpack.c.l.b16 %v200
    %v762 = vunpack.c.h.b16 %v200
    %v763 = vunpack.c.l.b16 %v201
    %v764 = vunpack.c.h.b16 %v201
    %v765 = vunpack.c.l.b16 %v202
    %v766 = vunpack.c.h.b16 %v202
    %v767 = vunpack.c.l.b16 %v203
    %v768 = vunpack.c.h.b16 %v203
    %v769 = vunpack.c.l.b16 %v204
    %v770 = vunpack.c.h.b16 %v204
    %v771 = vunpack.c.l.b16 %v205
    %v772 = vunpack.c.h.b16 %v205
    %v773 = vunpack.c.l.b16 %v206
    %v774 = vunpack.c.h.b16 %v206
    %v775 = vunpack.c.l.b16 %v207
    %v776 = vunpack.c.h.b16 %v207
    %v777 = vunpack.c.l.b16 %v208
    %v778 = vunpack.c.h.b16 %v208
    %v779 = vunpack.c.l.b16 %v209
    %v780 = vunpack.c.h.b16 %v209
    %v781 = vunpack.c.l.b16 %v210
    %v782 = vunpack.c.h.b16 %v210
    %v783 = vunpack.c.l.b16 %v211
    %v784 = vunpack.c.h.b16 %v211
    %v785 = vunpack.c.l.b16 %v212
    %v786 = vunpack.c.h.b16 %v212
    %v787 = vunpack.c.l.b16 %v213
    %v788 = vunpack.c.h.b16 %v213
    %v789 = vunpack.c.l.b16 %v214
    %v790 = vunpack.c.h.b16 %v214
    %v791 = vunpack.c.l.b16 %v215
    %v792 = vunpack.c.h.b16 %v215
    %v793 = vunpack.c.l.b16 %v216
    %v794 = vunpack.c.h.b16 %v216
    %v795 = vunpack.c.l.b16 %v217
    %v796 = vunpack.c.h.b16 %v217
    %v797 = vunpack.c.l.b16 %v218
    %v798 = vunpack.c.h.b16 %v218
    %v799 = vunpack.c.l.b16 %v219
    %v800 = vunpack.c.h.b16 %v219
    %v801 = vunpack.c.l.b16 %v220
    %v802 = vunpack.c.h.b16 %v220
    %v803 = vunpack.c.l.b16 %v221
    %v804 = vunpack.c.h.b16 %v221
    %v805 = vunpack.c.l.b16 %v222
    %v806 = vunpack.c.h.b16 %v222
    %v807 = vunpack.c.l.b16 %v223
    %v808 = vunpack.c.h.b16 %v223
    %v809 = vunpack.c.l.b16 %v224
    %v810 = vunpack.c.h.b16 %v224
    %v811 = vunpack.c.l.b16 %v225
    %v812 = vunpack.c.h.b16 %v225
    %v813 = vunpack.c.l.b16 %v226
    %v814 = vunpack.c.h.b16 %v226
    %v815 = vunpack.c.l.b16 %v227
    %v816 = vunpack.c.h.b16 %v227
    %v817 = vunpack.c.l.b16 %v228
    %v818 = vunpack.c.h.b16 %v228
    %v819 = vunpack.c.l.b16 %v229
    %v820 = vunpack.c.h.b16 %v229
    %v821 = vunpack.c.l.b16 %v230
    %v822 = vunpack.c.h.b16 %v230
    %v823 = vunpack.c.l.b16 %v231
    %v824 = vunpack.c.h.b16 %v231
    %v825 = vunpack.c.l.b16 %v232
    %v826 = vunpack.c.h.b16 %v232
    %v827 = vunpack.c.l.b16 %v233
    %v828 = vunpack.c.h.b16 %v233
    %v829 = vunpack.c.l.b16 %v234
    %v830 = vunpack.c.h.b16 %v234
    %v831 = vunpack.c.l.b16 %v235
    %v832 = vunpack.c.h.b16 %v235
    %v833 = vunpack.c.l.b16 %v236
    %v834 = vunpack.c.h.b16 %v236
    %v835 = vunpack.c.l.b16 %v237
    %v836 = vunpack.c.h.b16 %v237
    %v837 = vunpack.c.l.b16 %v238
    %v838 = vunpack.c.h.b16 %v238
    %v839 = vunpack.c.l.b16 %v239
    %v840 = vunpack.c.h.b16 %v239
    %v841 = vunpack.c.l.b16 %v240
    %v842 = vunpack.c.h.b16 %v240
    %v843 = vunpack.c.l.b16 %v241
    %v844 = vunpack.c.h.b16 %v241
    %v845 = vunpack.c.l.b16 %v242
    %v846 = vunpack.c.h.b16 %v242
    %v847 = vunpack.c.l.b16 %v243
    %v848 = vunpack.c.h.b16 %v243
    %v849 = vunpack.c.l.b16 %v244
    %v850 = vunpack.c.h.b16 %v244
    %v851 = vunpack.c.l.b16 %v245
    %v852 = vunpack.c.h.b16 %v245
    %v853 = vunpack.c.l.b16 %v246
    %v854 = vunpack.c.h.b16 %v246
    %v855 = vunpack.c.l.b16 %v247
    %v856 = vunpack.c.h.b16 %v247
    %v857 = vunpack.c.l.b16 %v248
    %v858 = vunpack.c.h.b16 %v248
    %v859 = vunpack.c.l.b16 %v249
    %v860 = vunpack.c.h.b16 %v249
    %v861 = vunpack.c.l.b16 %v250
    %v862 = vunpack.c.h.b16 %v250
    %v863 = vunpack.c.l.b16 %v251
    %v864 = vunpack.c.h.b16 %v251
    %v865 = vunpack.c.l.b16 %v252
    %v866 = vunpack.c.h.b16 %v252
    %v867 = vunpack.c.l.b16 %v253
    %v868 = vunpack.c.h.b16 %v253
    %v869 = vunpack.c.l.b16 %v254
    %v870 = vunpack.c.h.b16 %v254
    %v871 = vunpack.c.l.b16 %v255
    %v872 = vunpack.c.h.b16 %v255
    %v873 = vunpack.c.l.b16 %v256
    %v874 = vunpack.c.h.b16 %v256
    %v875 = vunpack.c.l.b16 %v257
    %v876 = vunpack.c.h.b16 %v257
    %v877 = vunpack.c.l.b16 %v258
    %v878 = vunpack.c.h.b16 %v258
    %v879 = vunpack.c.l.b16 %v259
    %v880 = vunpack.c.h.b16 %v259
    %v881 = vunpack.c.l.b16 %v260
    %v882 = vunpack.c.h.b16 %v260
    %v883 = vunpack.c.l.b16 %v261
    %v884 = vunpack.c.h.b16 %v261
    %v885 = vunpack.c.l.b16 %v262
    %v886 = vunpack.c.h.b16 %v262
    %v887 = vunpack.c.l.b16 %v263
    %v888 = vunpack.c.h.b16 %v263
    %v889 = vunpack.c.l.b16 %v264
    %v890 = vunpack.c.h.b16 %v264
    %v891 = vunpack.c.l.b16 %v265
    %v892 = vunpack.c.h.b16 %v265
    %v893 = vunpack.c.l.b16 %v266
    %v894 = vunpack.c.h.b16 %v266
    %v895 = vunpack.c.l.b16 %v267
    %v896 = vunpack.c.h.b16 %v267
    %v897 = vunpack.c.l.b16 %v268
    %v898 = vunpack.c.h.b16 %v268
    %v899 = vunpack.c.l.b16 %v269
    %v900 = vunpack.c.h.b16 %v269
    %v901 = vunpack.c.l.b16 %v270
    %v902 = vunpack.c.h.b16 %v270
    %v903 = vunpack.c.l.b16 %v271
    %v904 = vunpack.c.h.b16 %v271
    %v905 = vunpack.c.l.b16 %v272
    %v906 = vunpack.c.h.b16 %v272
    %v907 = vunpack.c.l.b16 %v273
    %v908 = vunpack.c.h.b16 %v273
    %v909 = vunpack.c.l.b16 %v274
    %v910 = vunpack.c.h.b16 %v274
    %v911 = vunpack.c.l.b16 %v275
    %v912 = vunpack.c.h.b16 %v275
    %v913 = vunpack.c.l.b16 %v276
    %v914 = vunpack.c.h.b16 %v276
    %v915 = vunpack.c.l.b16 %v277
    %v916 = vunpack.c.h.b16 %v277
    %v917 = vunpack.c.l.b16 %v278
    %v918 = vunpack.c.h.b16 %v278
    %v919 = vunpack.c.l.b16 %v279
    %v920 = vunpack.c.h.b16 %v279
    %v921 = vunpack.c.l.b16 %v280
    %v922 = vunpack.c.h.b16 %v280
    %v923 = vunpack.c.l.b16 %v281
    %v924 = vunpack.c.h.b16 %v281
    %v925 = vunpack.c.l.b16 %v282
    %v926 = vunpack.c.h.b16 %v282
    %v927 = vunpack.c.l.b16 %v283
    %v928 = vunpack.c.h.b16 %v283
    %v929 = vunpack.c.l.b16 %v284
    %v930 = vunpack.c.h.b16 %v284
    %v931 = vunpack.c.l.b16 %v285
    %v932 = vunpack.c.h.b16 %v285
    %v933 = vunpack.c.l.b16 %v286
    %v934 = vunpack.c.h.b16 %v286
    %v935 = vunpack.c.l.b16 %v287
    %v936 = vunpack.c.h.b16 %v287
    %v937 = vunpack.c.l.b16 %v288
    %v938 = vunpack.c.h.b16 %v288
    %v939 = vunpack.c.l.b16 %v289
    %v940 = vunpack.c.h.b16 %v289
    %v941 = vunpack.c.l.b16 %v290
    %v942 = vunpack.c.h.b16 %v290
    %v943 = vunpack.c.l.b16 %v291
    %v944 = vunpack.c.h.b16 %v291
    %v945 = vunpack.c.l.b16 %v292
    %v946 = vunpack.c.h.b16 %v292
    %v947 = vunpack.c.l.b16 %v293
    %v948 = vunpack.c.h.b16 %v293
    %v949 = vunpack.c.l.b16 %v294
    %v950 = vunpack.c.h.b16 %v294
    %v951 = vunpack.c.l.b16 %v295
    %v952 = vunpack.c.h.b16 %v295
    %v953 = vunpack.c.l.b16 %v296
    %v954 = vunpack.c.h.b16 %v296
    %v955 = vunpack.c.l.b16 %v297
    %v956 = vunpack.c.h.b16 %v297
    %v957 = vunpack.c.l.b16 %v298
    %v958 = vunpack.c.h.b16 %v298
    %v959 = vunpack.c.l.b16 %v299
    %v960 = vunpack.c.h.b16 %v299
    %v961 = vunpack.c.l.b16 %v300
    %v962 = vunpack.c.h.b16 %v300
    %v963 = vunpack.c.l.b16 %v301
    %v964 = vunpack.c.h.b16 %v301
    %v965 = vunpack.c.l.b16 %v302
    %v966 = vunpack.c.h.b16 %v302
    %v967 = vunpack.c.l.b16 %v303
    %v968 = vunpack.c.h.b16 %v303
    %v969 = vunpack.c.l.b16 %v304
    %v970 = vunpack.c.h.b16 %v304
    %v971 = vunpack.c.l.b16 %v305
    %v972 = vunpack.c.h.b16 %v305
    %v973 = vunpack.c.l.b16 %v306
    %v974 = vunpack.c.h.b16 %v306
    %v975 = vunpack.c.l.b16 %v307
    %v976 = vunpack.c.h.b16 %v307
    %v977 = vunpack.c.l.b16 %v308
    %v978 = vunpack.c.h.b16 %v308
    %v979 = vunpack.c.l.b16 %v309
    %v980 = vunpack.c.h.b16 %v309
    %v981 = vunpack.c.l.b16 %v310
    %v982 = vunpack.c.h.b16 %v310
    %v983 = vunpack.c.l.b16 %v311
    %v984 = vunpack.c.h.b16 %v311
    %v985 = vunpack.c.l.b16 %v312
    %v986 = vunpack.c.h.b16 %v312
    %v987 = vunpack.c.l.b16 %v313
    %v988 = vunpack.c.h.b16 %v313
    %v989 = vunpack.c.l.b16 %v314
    %v990 = vunpack.c.h.b16 %v314
    %v991 = vunpack.c.l.b16 %v315
    %v992 = vunpack.c.h.b16 %v315
    %v993 = vunpack.c.l.b16 %v316
    %v994 = vunpack.c.h.b16 %v316
    %v995 = vunpack.c.l.b16 %v317
    %v996 = vunpack.c.h.b16 %v317
    %v997 = vunpack.c.l.b16 %v318
    %v998 = vunpack.c.h.b16 %v318
    %v999 = vunpack.c.l.b16 %v319
    %v1000 = vunpack.c.h.b16 %v319
    %v1001 = vunpack.c.l.b16 %v320
    %v1002 = vunpack.c.h.b16 %v320
    %v1003 = vunpack.c.l.b16 %v321
    %v1004 = vunpack.c.h.b16 %v321
    %v1005 = vunpack.c.l.b16 %v322
    %v1006 = vunpack.c.h.b16 %v322
    %v1007 = vunpack.c.l.b16 %v323
    %v1008 = vunpack.c.h.b16 %v323
    %v1009 = vunpack.c.l.b16 %v324
    %v1010 = vunpack.c.h.b16 %v324
    %v1011 = vunpack.c.l.b16 %v325
    %v1012 = vunpack.c.h.b16 %v325
    %v1013 = vunpack.c.l.b16 %v326
    %v1014 = vunpack.c.h.b16 %v326
    %v1015 = vunpack.c.l.b16 %v327
    %v1016 = vunpack.c.h.b16 %v327
    %v1017 = vunpack.c.l.b16 %v328
    %v1018 = vunpack.c.h.b16 %v328
    %v1019 = vunpack.c.l.b16 %v329
    %v1020 = vunpack.c.h.b16 %v329
    %v1021 = vunpack.c.l.b16 %v330
    %v1022 = vunpack.c.h.b16 %v330
    %v1023 = vunpack.c.l.b16 %v331
    %v1024 = vunpack.c.h.b16 %v331
    %v1025 = vunpack.c.l.b16 %v332
    %v1026 = vunpack.c.h.b16 %v332
    %v1027 = vunpack.c.l.b16 %v333
    %v1028 = vunpack.c.h.b16 %v333
    %v1029 = vunpack.c.l.b16 %v334
    %v1030 = vunpack.c.h.b16 %v334
    %v1031 = vunpack.c.l.b16 %v335
    %v1032 = vunpack.c.h.b16 %v335
    %v1033 = vunpack.c.l.b16 %v336
    %v1034 = vunpack.c.h.b16 %v336
    %v1035 = vunpack.c.l.b16 %v337
    %v1036 = vunpack.c.h.b16 %v337
    %v1037 = vunpack.c.l.b16 %v338
    %v1038 = vunpack.c.h.b16 %v338
    %v1039 = vunpack.c.l.b16 %v339
    %v1040 = vunpack.c.h.b16 %v339
    %v1041 = vunpack.c.l.b16 %v340
    %v1042 = vunpack.c.h.b16 %v340
    %v1043 = vunpack.c.l.b16 %v341
    %v1044 = vunpack.c.h.b16 %v341
    %v1045 = vunpack.c.l.b16 %v342
    %v1046 = vunpack.c.h.b16 %v342
    %v1047 = vunpack.c.l.b16 %v343
    %v1048 = vunpack.c.h.b16 %v343
    %v1049 = vunpack.c.l.b16 %v344
    %v1050 = vunpack.c.h.b16 %v344
    %v1051 = vunpack.c.l.b16 %v345
    %v1052 = vunpack.c.h.b16 %v345
    %v1053 = vunpack.c.l.b16 %v346
    %v1054 = vunpack.c.h.b16 %v346
    %v1055 = vunpack.c.l.b16 %v347
    %v1056 = vunpack.c.h.b16 %v347
    %v1057 = vunpack.c.l.b16 %v348
    %v1058 = vunpack.c.h.b16 %v348
    %v1059 = vunpack.c.l.b16 %v349
    %v1060 = vunpack.c.h.b16 %v349
    %v1061 = vunpack.c.l.b16 %v350
    %v1062 = vunpack.c.h.b16 %v350
    %v1063 = vunpack.c.l.b16 %v351
    %v1064 = vunpack.c.h.b16 %v351
    %v1065 = vunpack.c.l.b16 %v352
    %v1066 = vunpack.c.h.b16 %v352
    %v1067 = vunpack.c.l.b16 %v353
    %v1068 = vunpack.c.h.b16 %v353
    %v1069 = vunpack.c.l.b16 %v354
    %v1070 = vunpack.c.h.b16 %v354
    %v1071 = vunpack.c.l.b16 %v355
    %v1072 = vunpack.c.h.b16 %v355
    %v1073 = vunpack.c.l.b16 %v356
    %v1074 = vunpack.c.h.b16 %v356
    %v1075 = vunpack.c.l.b16 %v357
    %v1076 = vunpack.c.h.b16 %v357
    %v1077 = vunpack.c.l.b16 %v358
    %v1078 = vunpack.c.h.b16 %v358
    %v1079 = vunpack.c.l.b16 %v359
    %v1080 = vunpack.c.h.b16 %v359
    %v1081 = vunpack.c.l.b16 %v360
    %v1082 = vunpack.c.h.b16 %v360
    %v1083 = vunpack.c.l.b16 %v361
    %v1084 = vunpack.c.h.b16 %v361
    %v1085 = vunpack.c.l.b16 %v362
    %v1086 = vunpack.c.h.b16 %v362
    %v1087 = vunpack.c.l.b16 %v363
    %v1088 = vunpack.c.h.b16 %v363
    %v1089 = vunpack.c.l.b16 %v364
    %v1090 = vunpack.c.h.b16 %v364
    %v1091 = vunpack.c.l.b16 %v365
    %v1092 = vunpack.c.h.b16 %v365
    %v1093 = vunpack.c.l.b16 %v366
    %v1094 = vunpack.c.h.b16 %v366
    %v1095 = vunpack.c.l.b16 %v367
    %v1096 = vunpack.c.h.b16 %v367
    %v1097 = vunpack.c.l.b16 %v368
    %v1098 = vunpack.c.h.b16 %v368
    %v1099 = vunpack.c.l.b16 %v369
    %v1100 = vunpack.c.h.b16 %v369
    %v1101 = vunpack.c.l.b16 %v370
    %v1102 = vunpack.c.h.b16 %v370
    %v1103 = vunpack.c.l.b16 %v371
    %v1104 = vunpack.c.h.b16 %v371
    %v1105 = vunpack.c.l.b16 %v372
    %v1106 = vunpack.c.h.b16 %v372
    %v1107 = vunpack.c.l.b16 %v373
    %v1108 = vunpack.c.h.b16 %v373
    %v1109 = vunpack.c.l.b16 %v374
    %v1110 = vunpack.c.h.b16 %v374
    %v1111 = vunpack.c.l.b16 %v375
    %v1112 = vunpack.c.h.b16 %v375
    %v1113 = vunpack.c.l.b16 %v376
    %v1114 = vunpack.c.h.b16 %v376
    %v1115 = vunpack.c.l.b16 %v377
    %v1116 = vunpack.c.h.b16 %v377
    %v1117 = vunpack.c.l.b16 %v378
    %v1118 = vunpack.c.h.b16 %v378
    %v1119 = vunpack.c.l.b16 %v379
    %v1120 = vunpack.c.h.b16 %v379
    %v1121 = vunpack.c.l.b16 %v380
    %v1122 = vunpack.c.h.b16 %v380
    %v1123 = vunpack.c.l.b16 %v381
    %v1124 = vunpack.c.h.b16 %v381
    %v1125 = vpack.c.b16 %v681, %v677
    %v1126 = vpack.c.b16 %v682, %v678
    %v1127 = vpack.c.b16 %v683, %v679
    %v1128 = vpack.c.b16 %v684, %v680
    %v1129 = vpack.c.b16 %v689, %v685
    %v1130 = vpack.c.b16 %v690, %v686
    %v1131 = vpack.c.b16 %v691, %v687
    %v1132 = vpack.c.b16 %v692, %v688
    %v1133 = vpack.c.b16 %v697, %v693
    %v1134 = vpack.c.b16 %v698, %v694
    %v1135 = vpack.c.b16 %v699, %v695
    %v1136 = vpack.c.b16 %v700, %v696
    %v1137 = vpack.c.b16 %v705, %v701
    %v1138 = vpack.c.b16 %v706, %v702
    %v1139 = vpack.c.b16 %v707, %v703
    %v1140 = vpack.c.b16 %v708, %v704
    %v1141 = vpack.c.b16 %v713, %v709
    %v1142 = vpack.c.b16 %v714, %v710
    %v1143 = vpack.c.b16 %v715, %v711
    %v1144 = vpack.c.b16 %v716, %v712
    %v1145 = vpack.c.b16 %v721, %v717
    %v1146 = vpack.c.b16 %v722, %v718
    %v1147 = vpack.c.b16 %v723, %v719
    %v1148 = vpack.c.b16 %v724, %v720
    %v1149 = vpack.c.b16 %v729, %v725
    %v1150 = vpack.c.b16 %v730, %v726
    %v1151 = vpack.c.b16 %v731, %v727
    %v1152 = vpack.c.b16 %v732, %v728
    %v1153 = vpack.c.b16 %v737, %v733
    %v1154 = vpack.c.b16 %v738, %v734
    %v1155 = vpack.c.b16 %v739, %v735
    %v1156 = vpack.c.b16 %v740, %v736
    %v1157 = vpack.c.b16 %v745, %v741
    %v1158 = vpack.c.b16 %v746, %v742
    %v1159 = vpack.c.b16 %v747, %v743
    %v1160 = vpack.c.b16 %v748, %v744
    %v1161 = vpack.c.b16 %v753, %v749
    %v1162 = vpack.c.b16 %v754, %v750
    %v1163 = vpack.c.b16 %v755, %v751
    %v1164 = vpack.c.b16 %v756, %v752
    %v1165 = vpack.c.b16 %v761, %v757
    %v1166 = vpack.c.b16 %v762, %v758
    %v1167 = vpack.c.b16 %v763, %v759
    %v1168 = vpack.c.b16 %v764, %v760
    %v1169 = vpack.c.b16 %v769, %v765
    %v1170 = vpack.c.b16 %v770, %v766
    %v1171 = vpack.c.b16 %v771, %v767
    %v1172 = vpack.c.b16 %v772, %v768
    %v1173 = vpack.c.b16 %v777, %v773
    %v1174 = vpack.c.b16 %v778, %v774
    %v1175 = vpack.c.b16 %v779, %v775
    %v1176 = vpack.c.b16 %v780, %v776
    %v1177 = vpack.c.b16 %v785, %v781
    %v1178 = vpack.c.b16 %v786, %v782
    %v1179 = vpack.c.b16 %v787, %v783
    %v1180 = vpack.c.b16 %v788, %v784
    %v1181 = vpack.c.b16 %v793, %v789
    %v1182 = vpack.c.b16 %v794, %v790
    %v1183 = vpack.c.b16 %v795, %v791
    %v1184 = vpack.c.b16 %v796, %v792
    %v1185 = vpack.c.b16 %v801, %v797
    %v1186 = vpack.c.b16 %v802, %v798
    %v1187 = vpack.c.b16 %v803, %v799
    %v1188 = vpack.c.b16 %v804, %v800
    %v1189 = vpack.c.b16 %v809, %v805
    %v1190 = vpack.c.b16 %v810, %v806
    %v1191 = vpack.c.b16 %v811, %v807
    %v1192 = vpack.c.b16 %v812, %v808
    %v1193 = vpack.c.b16 %v817, %v813
    %v1194 = vpack.c.b16 %v818, %v814
    %v1195 = vpack.c.b16 %v819, %v815
    %v1196 = vpack.c.b16 %v820, %v816
    %v1197 = vpack.c.b16 %v825, %v821
    %v1198 = vpack.c.b16 %v826, %v822
    %v1199 = vpack.c.b16 %v827, %v823
    %v1200 = vpack.c.b16 %v828, %v824
    %v1201 = vpack.c.b16 %v833, %v829
    %v1202 = vpack.c.b16 %v834, %v830
    %v1203 = vpack.c.b16 %v835, %v831
    %v1204 = vpack.c.b16 %v836, %v832
    %v1205 = vpack.c.b16 %v841, %v837
    %v1206 = vpack.c.b16 %v842, %v838
    %v1207 = vpack.c.b16 %v843, %v839
    %v1208 = vpack.c.b16 %v844, %v840
    %v1209 = vpack.c.b16 %v849, %v845
    %v1210 = vpack.c.b16 %v850, %v846
    %v1211 = vpack.c.b16 %v851, %v847
    %v1212 = vpack.c.b16 %v852, %v848
    %v1213 = vpack.c.b16 %v857, %v853
    %v1214 = vpack.c.b16 %v858, %v854
    %v1215 = vpack.c.b16 %v859, %v855
    %v1216 = vpack.c.b16 %v860, %v856
    %v1217 = vpack.c.b16 %v865, %v861
    %v1218 = vpack.c.b16 %v866, %v862
    %v1219 = vpack.c.b16 %v867, %v863
    %v1220 = vpack.c.b16 %v868, %v864
    %v1221 = vpack.c.b16 %v873, %v869
    %v1222 = vpack.c.b16 %v874, %v870
    %v1223 = vpack.c.b16 %v875, %v871
    %v1224 = vpack.c.b16 %v876, %v872
    %v1225 = vpack.c.b16 %v881, %v877
    %v1226 = vpack.c.b16 %v882, %v878
    %v1227 = vpack.c.b16 %v883, %v879
    %v1228 = vpack.c.b16 %v884, %v880
    %v1229 = vpack.c.b16 %v889, %v885
    %v1230 = vpack.c.b16 %v890, %v886
    %v1231 = vpack.c.b16 %v891, %v887
    %v1232 = vpack.c.b16 %v892, %v888
    %v1233 = vpack.c.b16 %v897, %v893
    %v1234 = vpack.c.b16 %v898, %v894
    %v1235 = vpack.c.b16 %v899, %v895
    %v1236 = vpack.c.b16 %v900, %v896
    %v1237 = vpack.c.b16 %v905, %v901
    %v1238 = vpack.c.b16 %v906, %v902
    %v1239 = vpack.c.b16 %v907, %v903
    %v1240 = vpack.c.b16 %v908, %v904
    %v1241 = vpack.c.b16 %v913, %v909
    %v1242 = vpack.c.b16 %v914, %v910
    %v1243 = vpack.c.b16 %v915, %v911
    %v1244 = vpack.c.b16 %v916, %v912
    %v1245 = vpack.c.b16 %v921, %v917
    %v1246 = vpack.c.b16 %v922, %v918
    %v1247 = vpack.c.b16 %v923, %v919
    %v1248 = vpack.c.b16 %v924, %v920
    %v1249 = vpack.c.b16 %v929, %v925
    %v1250 = vpack.c.b16 %v930, %v926
    %v1251 = vpack.c.b16 %v931, %v927
    %v1252 = vpack.c.b16 %v932, %v928
    %v1253 = vpack.c.b16 %v937, %v933
    %v1254 = vpack.c.b16 %v938, %v934
    %v1255 = vpack.c.b16 %v939, %v935
    %v1256 = vpack.c.b16 %v940, %v936
    %v1257 = vpack.c.b16 %v945, %v941
    %v1258 = vpack.c.b16 %v946, %v942
    %v1259 = vpack.c.b16 %v947, %v943
    %v1260 = vpack.c.b16 %v948, %v944
    %v1261 = vpack.c.b16 %v953, %v949
    %v1262 = vpack.c.b16 %v954, %v950
    %v1263 = vpack.c.b16 %v955, %v951
    %v1264 = vpack.c.b16 %v956, %v952
    %v1265 = vpack.c.b16 %v961, %v957
    %v1266 = vpack.c.b16 %v962, %v958
    %v1267 = vpack.c.b16 %v963, %v959
    %v1268 = vpack.c.b16 %v964, %v960
    %v1269 = vpack.c.b16 %v969, %v965
    %v1270 = vpack.c.b16 %v970, %v966
    %v1271 = vpack.c.b16 %v971, %v967
    %v1272 = vpack.c.b16 %v972, %v968
    %v1273 = vpack.c.b16 %v977, %v973
    %v1274 = vpack.c.b16 %v978, %v974
    %v1275 = vpack.c.b16 %v979, %v975
    %v1276 = vpack.c.b16 %v980, %v976
    %v1277 = vpack.c.b16 %v985, %v981
    %v1278 = vpack.c.b16 %v986, %v982
    %v1279 = vpack.c.b16 %v987, %v983
    %v1280 = vpack.c.b16 %v988, %v984
    %v1281 = vpack.c.b16 %v993, %v989
    %v1282 = vpack.c.b16 %v994, %v990
    %v1283 = vpack.c.b16 %v995, %v991
    %v1284 = vpack.c.b16 %v996, %v992
    %v1285 = vpack.c.b16 %v1001, %v997
    %v1286 = vpack.c.b16 %v1002, %v998
    %v1287 = vpack.c.b16 %v1003, %v999
    %v1288 = vpack.c.b16 %v1004, %v1000
    %v1289 = vpack.c.b16 %v1009, %v1005
    %v1290 = vpack.c.b16 %v1010, %v1006
    %v1291 = vpack.c.b16 %v1011, %v1007
    %v1292 = vpack.c.b16 %v1012, %v1008
    %v1293 = vpack.c.b16 %v1017, %v1013
    %v1294 = vpack.c.b16 %v1018, %v1014
    %v1295 = vpack.c.b16 %v1019, %v1015
    %v1296 = vpack.c.b16 %v1020, %v1016
    %v1297 = vpack.c.b16 %v1025, %v1021
    %v1298 = vpack.c.b16 %v1026, %v1022
    %v1299 = vpack.c.b16 %v1027, %v1023
    %v1300 = vpack.c.b16 %v1028, %v1024
    %v1301 = vpack.c.b16 %v1033, %v1029
    %v1302 = vpack.c.b16 %v1034, %v1030
    %v1303 = vpack.c.b16 %v1035, %v1031
    %v1304 = vpack.c.b16 %v1036, %v1032
    %v1305 = vpack.c.b16 %v1041, %v1037
    %v1306 = vpack.c.b16 %v1042, %v1038
    %v1307 = vpack.c.b16 %v1043, %v1039
    %v1308 = vpack.c.b16 %v1044, %v1040
    %v1309 = vpack.c.b16 %v1049, %v1045
    %v1310 = vpack.c.b16 %v1050, %v1046
    %v1311 = vpack.c.b16 %v1051, %v1047
    %v1312 = vpack.c.b16 %v1052, %v1048
    %v1313 = vpack.c.b16 %v1057, %v1053
    %v1314 = vpack.c.b16 %v1058, %v1054
    %v1315 = vpack.c.b16 %v1059, %v1055
    %v1316 = vpack.c.b16 %v1060, %v1056
    %v1317 = vpack.c.b16 %v1065, %v1061
    %v1318 = vpack.c.b16 %v1066, %v1062
    %v1319 = vpack.c.b16 %v1067, %v1063
    %v1320 = vpack.c.b16 %v1068, %v1064
    %v1321 = vpack.c.b16 %v1073, %v1069
    %v1322 = vpack.c.b16 %v1074, %v1070
    %v1323 = vpack.c.b16 %v1075, %v1071
    %v1324 = vpack.c.b16 %v1076, %v1072
    %v1325 = vpack.c.b16 %v1081, %v1077
    %v1326 = vpack.c.b16 %v1082, %v1078
    %v1327 = vpack.c.b16 %v1083, %v1079
    %v1328 = vpack.c.b16 %v1084, %v1080
    %v1329 = vpack.c.b16 %v1089, %v1085
    %v1330 = vpack.c.b16 %v1090, %v1086
    %v1331 = vpack.c.b16 %v1091, %v1087
    %v1332 = vpack.c.b16 %v1092, %v1088
    %v1333 = vpack.c.b16 %v1097, %v1093
    %v1334 = vpack.c.b16 %v1098, %v1094
    %v1335 = vpack.c.b16 %v1099, %v1095
    %v1336 = vpack.c.b16 %v1100, %v1096
    %v1337 = vpack.c.b16 %v1105, %v1101
    %v1338 = vpack.c.b16 %v1106, %v1102
    %v1339 = vpack.c.b16 %v1107, %v1103
    %v1340 = vpack.c.b16 %v1108, %v1104
    %v1341 = vpack.c.b16 %v1113, %v1109
    %v1342 = vpack.c.b16 %v1114, %v1110
    %v1343 = vpack.c.b16 %v1115, %v1111
    %v1344 = vpack.c.b16 %v1116, %v1112
    %v1345 = vpack.c.b16 %v1121, %v1117
    %v1346 = vpack.c.b16 %v1122, %v1118
    %v1347 = vpack.c.b16 %v1123, %v1119
    %v1348 = vpack.c.b16 %v1124, %v1120
    %1573 = vmatpush.bf16.msra.mxu0 %v1153
    %1574 = vmatpush.bf16.msra.mxu0 %v1149
    %1575 = vmatpush.bf16.msra.mxu0 %v1145
    %1576 = vmatpush.bf16.msra.mxu0 %v1141
    %1577 = vmatpush.bf16.msra.mxu0 %v1137
    %1578 = vmatpush.bf16.msra.mxu0 %v1133
    %1579 = vmatpush.bf16.msra.mxu0 %v1129
    %1580 = vmatpush.bf16.msra.mxu0 %v1125
    %1581 = vmatmul.bf16.gmra.mxu0 %v425
    %v1582 = vpop.f32.mrf.mxu0
    %v1583 = vadd.f32 %v384, %v1582
    %v1584 = vpop.f32.mrf.mxu0
    %v1585 = vadd.f32 %v384, %v1584
    %1586 = vmatmul.bf16.gmra.mxu0 %v432
    %v1587 = vpop.f32.mrf.mxu0
    %v1588 = vadd.f32 %v384, %v1587
    %v1589 = vpop.f32.mrf.mxu0
    %1590 = vdwg.mxu0
    %1591 = vmatpush.bf16.msra.mxu0 %v1185
    %1592 = vmatpush.bf16.msra.mxu0 %v1181
    %1593 = vmatpush.bf16.msra.mxu0 %v1177
    %1594 = vmatpush.bf16.msra.mxu0 %v1173
    %1595 = vmatpush.bf16.msra.mxu0 %v1169
    %1596 = vmatpush.bf16.msra.mxu0 %v1165
    %1597 = vmatpush.bf16.msra.mxu0 %v1161
    %1598 = vmatpush.bf16.msra.mxu0 %v1157
    %1599 = vmatmul.bf16.gmra.mxu0 %v426
    %v1600 = vpop.f32.mrf.mxu0
    %v1601 = vadd.f32 %v1583, %v1600
    %v1602 = vpop.f32.mrf.mxu0
    %v1603 = vadd.f32 %v1585, %v1602
    %1604 = vmatmul.bf16.gmra.mxu0 %v433
    %v1605 = vpop.f32.mrf.mxu0
    %v1606 = vadd.f32 %v1588, %v1605
    %v1607 = vpop.f32.mrf.mxu0
    %1608 = vdwg.mxu0
    %1609 = vmatpush.bf16.msra.mxu0 %v1217
    %1610 = vmatpush.bf16.msra.mxu0 %v1213
    %1611 = vmatpush.bf16.msra.mxu0 %v1209
    %1612 = vmatpush.bf16.msra.mxu0 %v1205
    %1613 = vmatpush.bf16.msra.mxu0 %v1201
    %1614 = vmatpush.bf16.msra.mxu0 %v1197
    %1615 = vmatpush.bf16.msra.mxu0 %v1193
    %1616 = vmatpush.bf16.msra.mxu0 %v1189
    %1617 = vmatmul.bf16.gmra.mxu0 %v427
    %v1618 = vpop.f32.mrf.mxu0
    %v1619 = vadd.f32 %v1601, %v1618
    %v1620 = vpop.f32.mrf.mxu0
    %v1621 = vadd.f32 %v1603, %v1620
    %1622 = vmatmul.bf16.gmra.mxu0 %v434
    %v1623 = vpop.f32.mrf.mxu0
    %v1624 = vadd.f32 %v1606, %v1623
    %v1625 = vpop.f32.mrf.mxu0
    %1626 = vdwg.mxu0
    %1627 = vmatpush.bf16.msra.mxu0 %v1249
    %1628 = vmatpush.bf16.msra.mxu0 %v1245
    %1629 = vmatpush.bf16.msra.mxu0 %v1241
    %1630 = vmatpush.bf16.msra.mxu0 %v1237
    %1631 = vmatpush.bf16.msra.mxu0 %v1233
    %1632 = vmatpush.bf16.msra.mxu0 %v1229
    %1633 = vmatpush.bf16.msra.mxu0 %v1225
    %1634 = vmatpush.bf16.msra.mxu0 %v1221
    %1635 = vmatmul.bf16.gmra.mxu0 %v428
    %v1636 = vpop.f32.mrf.mxu0
    %v1637 = vadd.f32 %v1619, %v1636
    %v1638 = vpop.f32.mrf.mxu0
    %v1639 = vadd.f32 %v1621, %v1638
    %1640 = vmatmul.bf16.gmra.mxu0 %v435
    %v1641 = vpop.f32.mrf.mxu0
    %v1642 = vadd.f32 %v1624, %v1641
    %v1643 = vpop.f32.mrf.mxu0
    %1644 = vdwg.mxu0
    %1645 = vmatpush.bf16.msra.mxu0 %v1281
    %1646 = vmatpush.bf16.msra.mxu0 %v1277
    %1647 = vmatpush.bf16.msra.mxu0 %v1273
    %1648 = vmatpush.bf16.msra.mxu0 %v1269
    %1649 = vmatpush.bf16.msra.mxu0 %v1265
    %1650 = vmatpush.bf16.msra.mxu0 %v1261
    %1651 = vmatpush.bf16.msra.mxu0 %v1257
    %1652 = vmatpush.bf16.msra.mxu0 %v1253
    %1653 = vmatmul.bf16.gmra.mxu0 %v429
    %v1654 = vpop.f32.mrf.mxu0
    %v1655 = vadd.f32 %v1637, %v1654
    %v1656 = vpop.f32.mrf.mxu0
    %v1657 = vadd.f32 %v1639, %v1656
    %1658 = vmatmul.bf16.gmra.mxu0 %v436
    %v1659 = vpop.f32.mrf.mxu0
    %v1660 = vadd.f32 %v1642, %v1659
    %v1661 = vpop.f32.mrf.mxu0
    %1662 = vdwg.mxu0
    %1663 = vmatpush.bf16.msra.mxu0 %v1313
    %1664 = vmatpush.bf16.msra.mxu0 %v1309
    %1665 = vmatpush.bf16.msra.mxu0 %v1305
    %1666 = vmatpush.bf16.msra.mxu0 %v1301
    %1667 = vmatpush.bf16.msra.mxu0 %v1297
    %1668 = vmatpush.bf16.msra.mxu0 %v1293
    %1669 = vmatpush.bf16.msra.mxu0 %v1289
    %1670 = vmatpush.bf16.msra.mxu0 %v1285
    %1671 = vmatmul.bf16.gmra.mxu0 %v430
    %v1672 = vpop.f32.mrf.mxu0
    %v1673 = vadd.f32 %v1655, %v1672
    %v1674 = vpop.f32.mrf.mxu0
    %v1675 = vadd.f32 %v1657, %v1674
    %1676 = vmatmul.bf16.gmra.mxu0 %v437
    %v1677 = vpop.f32.mrf.mxu0
    %v1678 = vadd.f32 %v1660, %v1677
    %v1679 = vpop.f32.mrf.mxu0
    %1680 = vdwg.mxu0
    %1681 = vmatpush.bf16.msra.mxu0 %v1345
    %1682 = vmatpush.bf16.msra.mxu0 %v1341
    %1683 = vmatpush.bf16.msra.mxu0 %v1337
    %1684 = vmatpush.bf16.msra.mxu0 %v1333
    %1685 = vmatpush.bf16.msra.mxu0 %v1329
    %1686 = vmatpush.bf16.msra.mxu0 %v1325
    %1687 = vmatpush.bf16.msra.mxu0 %v1321
    %1688 = vmatpush.bf16.msra.mxu0 %v1317
    %1689 = vmatmul.bf16.gmra.mxu0 %v431
    %v1690 = vpop.f32.mrf.mxu0
    %v1691 = vadd.f32 %v1673, %v1690
    %v1692 = vpop.f32.mrf.mxu0
    %v1693 = vadd.f32 %v1675, %v1692
    %1694 = vmatmul.bf16.gmra.mxu0 %v438
    %v1695 = vpop.f32.mrf.mxu0
    %v1696 = vadd.f32 %v1678, %v1695
    %v1697 = vpop.f32.mrf.mxu0
    %1698 = vdwg.mxu0
    %1699 = vmatpush.bf16.msra.mxu0 %v1154
    %1700 = vmatpush.bf16.msra.mxu0 %v1150
    %1701 = vmatpush.bf16.msra.mxu0 %v1146
    %1702 = vmatpush.bf16.msra.mxu0 %v1142
    %1703 = vmatpush.bf16.msra.mxu0 %v1138
    %1704 = vmatpush.bf16.msra.mxu0 %v1134
    %1705 = vmatpush.bf16.msra.mxu0 %v1130
    %1706 = vmatpush.bf16.msra.mxu0 %v1126
    %1707 = vmatmul.bf16.gmra.mxu0 %v425
    %v1708 = vpop.f32.mrf.mxu0
    %v1709 = vadd.f32 %v385, %v1708
    %v1710 = vpop.f32.mrf.mxu0
    %v1711 = vadd.f32 %v385, %v1710
    %1712 = vmatmul.bf16.gmra.mxu0 %v432
    %v1713 = vpop.f32.mrf.mxu0
    %v1714 = vadd.f32 %v385, %v1713
    %v1715 = vpop.f32.mrf.mxu0
    %1716 = vdwg.mxu0
    %1717 = vmatpush.bf16.msra.mxu0 %v1186
    %1718 = vmatpush.bf16.msra.mxu0 %v1182
    %1719 = vmatpush.bf16.msra.mxu0 %v1178
    %1720 = vmatpush.bf16.msra.mxu0 %v1174
    %1721 = vmatpush.bf16.msra.mxu0 %v1170
    %1722 = vmatpush.bf16.msra.mxu0 %v1166
    %1723 = vmatpush.bf16.msra.mxu0 %v1162
    %1724 = vmatpush.bf16.msra.mxu0 %v1158
    %1725 = vmatmul.bf16.gmra.mxu0 %v426
    %v1726 = vpop.f32.mrf.mxu0
    %v1727 = vadd.f32 %v1709, %v1726
    %v1728 = vpop.f32.mrf.mxu0
    %v1729 = vadd.f32 %v1711, %v1728
    %1730 = vmatmul.bf16.gmra.mxu0 %v433
    %v1731 = vpop.f32.mrf.mxu0
    %v1732 = vadd.f32 %v1714, %v1731
    %v1733 = vpop.f32.mrf.mxu0
    %1734 = vdwg.mxu0
    %1735 = vmatpush.bf16.msra.mxu0 %v1218
    %1736 = vmatpush.bf16.msra.mxu0 %v1214
    %1737 = vmatpush.bf16.msra.mxu0 %v1210
    %1738 = vmatpush.bf16.msra.mxu0 %v1206
    %1739 = vmatpush.bf16.msra.mxu0 %v1202
    %1740 = vmatpush.bf16.msra.mxu0 %v1198
    %1741 = vmatpush.bf16.msra.mxu0 %v1194
    %1742 = vmatpush.bf16.msra.mxu0 %v1190
    %1743 = vmatmul.bf16.gmra.mxu0 %v427
    %v1744 = vpop.f32.mrf.mxu0
    %v1745 = vadd.f32 %v1727, %v1744
    %v1746 = vpop.f32.mrf.mxu0
    %v1747 = vadd.f32 %v1729, %v1746
    %1748 = vmatmul.bf16.gmra.mxu0 %v434
    %v1749 = vpop.f32.mrf.mxu0
    %v1750 = vadd.f32 %v1732, %v1749
    %v1751 = vpop.f32.mrf.mxu0
    %1752 = vdwg.mxu0
    %1753 = vmatpush.bf16.msra.mxu0 %v1250
    %1754 = vmatpush.bf16.msra.mxu0 %v1246
    %1755 = vmatpush.bf16.msra.mxu0 %v1242
    %1756 = vmatpush.bf16.msra.mxu0 %v1238
    %1757 = vmatpush.bf16.msra.mxu0 %v1234
    %1758 = vmatpush.bf16.msra.mxu0 %v1230
    %1759 = vmatpush.bf16.msra.mxu0 %v1226
    %1760 = vmatpush.bf16.msra.mxu0 %v1222
    %1761 = vmatmul.bf16.gmra.mxu0 %v428
    %v1762 = vpop.f32.mrf.mxu0
    %v1763 = vadd.f32 %v1745, %v1762
    %v1764 = vpop.f32.mrf.mxu0
    %v1765 = vadd.f32 %v1747, %v1764
    %1766 = vmatmul.bf16.gmra.mxu0 %v435
    %v1767 = vpop.f32.mrf.mxu0
    %v1768 = vadd.f32 %v1750, %v1767
    %v1769 = vpop.f32.mrf.mxu0
    %1770 = vdwg.mxu0
    %1771 = vmatpush.bf16.msra.mxu0 %v1282
    %1772 = vmatpush.bf16.msra.mxu0 %v1278
    %1773 = vmatpush.bf16.msra.mxu0 %v1274
    %1774 = vmatpush.bf16.msra.mxu0 %v1270
    %1775 = vmatpush.bf16.msra.mxu0 %v1266
    %1776 = vmatpush.bf16.msra.mxu0 %v1262
    %1777 = vmatpush.bf16.msra.mxu0 %v1258
    %1778 = vmatpush.bf16.msra.mxu0 %v1254
    %1779 = vmatmul.bf16.gmra.mxu0 %v429
    %v1780 = vpop.f32.mrf.mxu0
    %v1781 = vadd.f32 %v1763, %v1780
    %v1782 = vpop.f32.mrf.mxu0
    %v1783 = vadd.f32 %v1765, %v1782
    %1784 = vmatmul.bf16.gmra.mxu0 %v436
    %v1785 = vpop.f32.mrf.mxu0
    %v1786 = vadd.f32 %v1768, %v1785
    %v1787 = vpop.f32.mrf.mxu0
    %1788 = vdwg.mxu0
    %1789 = vmatpush.bf16.msra.mxu0 %v1314
    %1790 = vmatpush.bf16.msra.mxu0 %v1310
    %1791 = vmatpush.bf16.msra.mxu0 %v1306
    %1792 = vmatpush.bf16.msra.mxu0 %v1302
    %1793 = vmatpush.bf16.msra.mxu0 %v1298
    %1794 = vmatpush.bf16.msra.mxu0 %v1294
    %1795 = vmatpush.bf16.msra.mxu0 %v1290
    %1796 = vmatpush.bf16.msra.mxu0 %v1286
    %1797 = vmatmul.bf16.gmra.mxu0 %v430
    %v1798 = vpop.f32.mrf.mxu0
    %v1799 = vadd.f32 %v1781, %v1798
    %v1800 = vpop.f32.mrf.mxu0
    %v1801 = vadd.f32 %v1783, %v1800
    %1802 = vmatmul.bf16.gmra.mxu0 %v437
    %v1803 = vpop.f32.mrf.mxu0
    %v1804 = vadd.f32 %v1786, %v1803
    %v1805 = vpop.f32.mrf.mxu0
    %1806 = vdwg.mxu0
    %1807 = vmatpush.bf16.msra.mxu0 %v1346
    %1808 = vmatpush.bf16.msra.mxu0 %v1342
    %1809 = vmatpush.bf16.msra.mxu0 %v1338
    %1810 = vmatpush.bf16.msra.mxu0 %v1334
    %1811 = vmatpush.bf16.msra.mxu0 %v1330
    %1812 = vmatpush.bf16.msra.mxu0 %v1326
    %1813 = vmatpush.bf16.msra.mxu0 %v1322
    %1814 = vmatpush.bf16.msra.mxu0 %v1318
    %1815 = vmatmul.bf16.gmra.mxu0 %v431
    %v1816 = vpop.f32.mrf.mxu0
    %v1817 = vadd.f32 %v1799, %v1816
    %v1818 = vpop.f32.mrf.mxu0
    %v1819 = vadd.f32 %v1801, %v1818
    %1820 = vmatmul.bf16.gmra.mxu0 %v438
    %v1821 = vpop.f32.mrf.mxu0
    %v1822 = vadd.f32 %v1804, %v1821
    %v1823 = vpop.f32.mrf.mxu0
    %1824 = vdwg.mxu0
    %1825 = vmatpush.bf16.msra.mxu0 %v1155
    %1826 = vmatpush.bf16.msra.mxu0 %v1151
    %1827 = vmatpush.bf16.msra.mxu0 %v1147
    %1828 = vmatpush.bf16.msra.mxu0 %v1143
    %1829 = vmatpush.bf16.msra.mxu0 %v1139
    %1830 = vmatpush.bf16.msra.mxu0 %v1135
    %1831 = vmatpush.bf16.msra.mxu0 %v1131
    %1832 = vmatpush.bf16.msra.mxu0 %v1127
    %1833 = vmatmul.bf16.gmra.mxu0 %v425
    %v1834 = vpop.f32.mrf.mxu0
    %v1835 = vadd.f32 %v386, %v1834
    %v1836 = vpop.f32.mrf.mxu0
    %v1837 = vadd.f32 %v386, %v1836
    %1838 = vmatmul.bf16.gmra.mxu0 %v432
    %v1839 = vpop.f32.mrf.mxu0
    %v1840 = vadd.f32 %v386, %v1839
    %v1841 = vpop.f32.mrf.mxu0
    %1842 = vdwg.mxu0
    %1843 = vmatpush.bf16.msra.mxu0 %v1187
    %1844 = vmatpush.bf16.msra.mxu0 %v1183
    %1845 = vmatpush.bf16.msra.mxu0 %v1179
    %1846 = vmatpush.bf16.msra.mxu0 %v1175
    %1847 = vmatpush.bf16.msra.mxu0 %v1171
    %1848 = vmatpush.bf16.msra.mxu0 %v1167
    %1849 = vmatpush.bf16.msra.mxu0 %v1163
    %1850 = vmatpush.bf16.msra.mxu0 %v1159
    %1851 = vmatmul.bf16.gmra.mxu0 %v426
    %v1852 = vpop.f32.mrf.mxu0
    %v1853 = vadd.f32 %v1835, %v1852
    %v1854 = vpop.f32.mrf.mxu0
    %v1855 = vadd.f32 %v1837, %v1854
    %1856 = vmatmul.bf16.gmra.mxu0 %v433
    %v1857 = vpop.f32.mrf.mxu0
    %v1858 = vadd.f32 %v1840, %v1857
    %v1859 = vpop.f32.mrf.mxu0
    %1860 = vdwg.mxu0
    %1861 = vmatpush.bf16.msra.mxu0 %v1219
    %1862 = vmatpush.bf16.msra.mxu0 %v1215
    %1863 = vmatpush.bf16.msra.mxu0 %v1211
    %1864 = vmatpush.bf16.msra.mxu0 %v1207
    %1865 = vmatpush.bf16.msra.mxu0 %v1203
    %1866 = vmatpush.bf16.msra.mxu0 %v1199
    %1867 = vmatpush.bf16.msra.mxu0 %v1195
    %1868 = vmatpush.bf16.msra.mxu0 %v1191
    %1869 = vmatmul.bf16.gmra.mxu0 %v427
    %v1870 = vpop.f32.mrf.mxu0
    %v1871 = vadd.f32 %v1853, %v1870
    %v1872 = vpop.f32.mrf.mxu0
    %v1873 = vadd.f32 %v1855, %v1872
    %1874 = vmatmul.bf16.gmra.mxu0 %v434
    %v1875 = vpop.f32.mrf.mxu0
    %v1876 = vadd.f32 %v1858, %v1875
    %v1877 = vpop.f32.mrf.mxu0
    %1878 = vdwg.mxu0
    %1879 = vmatpush.bf16.msra.mxu0 %v1251
    %1880 = vmatpush.bf16.msra.mxu0 %v1247
    %1881 = vmatpush.bf16.msra.mxu0 %v1243
    %1882 = vmatpush.bf16.msra.mxu0 %v1239
    %1883 = vmatpush.bf16.msra.mxu0 %v1235
    %1884 = vmatpush.bf16.msra.mxu0 %v1231
    %1885 = vmatpush.bf16.msra.mxu0 %v1227
    %1886 = vmatpush.bf16.msra.mxu0 %v1223
    %1887 = vmatmul.bf16.gmra.mxu0 %v428
    %v1888 = vpop.f32.mrf.mxu0
    %v1889 = vadd.f32 %v1871, %v1888
    %v1890 = vpop.f32.mrf.mxu0
    %v1891 = vadd.f32 %v1873, %v1890
    %1892 = vmatmul.bf16.gmra.mxu0 %v435
    %v1893 = vpop.f32.mrf.mxu0
    %v1894 = vadd.f32 %v1876, %v1893
    %v1895 = vpop.f32.mrf.mxu0
    %1896 = vdwg.mxu0
    %1897 = vmatpush.bf16.msra.mxu0 %v1283
    %1898 = vmatpush.bf16.msra.mxu0 %v1279
    %1899 = vmatpush.bf16.msra.mxu0 %v1275
    %1900 = vmatpush.bf16.msra.mxu0 %v1271
    %1901 = vmatpush.bf16.msra.mxu0 %v1267
    %1902 = vmatpush.bf16.msra.mxu0 %v1263
    %1903 = vmatpush.bf16.msra.mxu0 %v1259
    %1904 = vmatpush.bf16.msra.mxu0 %v1255
    %1905 = vmatmul.bf16.gmra.mxu0 %v429
    %v1906 = vpop.f32.mrf.mxu0
    %v1907 = vadd.f32 %v1889, %v1906
    %v1908 = vpop.f32.mrf.mxu0
    %v1909 = vadd.f32 %v1891, %v1908
    %1910 = vmatmul.bf16.gmra.mxu0 %v436
    %v1911 = vpop.f32.mrf.mxu0
    %v1912 = vadd.f32 %v1894, %v1911
    %v1913 = vpop.f32.mrf.mxu0
    %1914 = vdwg.mxu0
    %1915 = vmatpush.bf16.msra.mxu0 %v1315
    %1916 = vmatpush.bf16.msra.mxu0 %v1311
    %1917 = vmatpush.bf16.msra.mxu0 %v1307
    %1918 = vmatpush.bf16.msra.mxu0 %v1303
    %1919 = vmatpush.bf16.msra.mxu0 %v1299
    %1920 = vmatpush.bf16.msra.mxu0 %v1295
    %1921 = vmatpush.bf16.msra.mxu0 %v1291
    %1922 = vmatpush.bf16.msra.mxu0 %v1287
    %1923 = vmatmul.bf16.gmra.mxu0 %v430
    %v1924 = vpop.f32.mrf.mxu0
    %v1925 = vadd.f32 %v1907, %v1924
    %v1926 = vpop.f32.mrf.mxu0
    %v1927 = vadd.f32 %v1909, %v1926
    %1928 = vmatmul.bf16.gmra.mxu0 %v437
    %v1929 = vpop.f32.mrf.mxu0
    %v1930 = vadd.f32 %v1912, %v1929
    %v1931 = vpop.f32.mrf.mxu0
    %1932 = vdwg.mxu0
    %1933 = vmatpush.bf16.msra.mxu0 %v1347
    %1934 = vmatpush.bf16.msra.mxu0 %v1343
    %1935 = vmatpush.bf16.msra.mxu0 %v1339
    %1936 = vmatpush.bf16.msra.mxu0 %v1335
    %1937 = vmatpush.bf16.msra.mxu0 %v1331
    %1938 = vmatpush.bf16.msra.mxu0 %v1327
    %1939 = vmatpush.bf16.msra.mxu0 %v1323
    %1940 = vmatpush.bf16.msra.mxu0 %v1319
    %1941 = vmatmul.bf16.gmra.mxu0 %v431
    %v1942 = vpop.f32.mrf.mxu0
    %v1943 = vadd.f32 %v1925, %v1942
    %v1944 = vpop.f32.mrf.mxu0
    %v1945 = vadd.f32 %v1927, %v1944
    %1946 = vmatmul.bf16.gmra.mxu0 %v438
    %v1947 = vpop.f32.mrf.mxu0
    %v1948 = vadd.f32 %v1930, %v1947
    %v1949 = vpop.f32.mrf.mxu0
    %1950 = vdwg.mxu0
    %1951 = vmatpush.bf16.msra.mxu0 %v1156
    %1952 = vmatpush.bf16.msra.mxu0 %v1152
    %1953 = vmatpush.bf16.msra.mxu0 %v1148
    %1954 = vmatpush.bf16.msra.mxu0 %v1144
    %1955 = vmatpush.bf16.msra.mxu0 %v1140
    %1956 = vmatpush.bf16.msra.mxu0 %v1136
    %1957 = vmatpush.bf16.msra.mxu0 %v1132
    %1958 = vmatpush.bf16.msra.mxu0 %v1128
    %1959 = vmatmul.bf16.gmra.mxu0 %v425
    %v1960 = vpop.f32.mrf.mxu0
    %v1961 = vadd.f32 %v387, %v1960
    %v1962 = vpop.f32.mrf.mxu0
    %v1963 = vadd.f32 %v387, %v1962
    %1964 = vmatmul.bf16.gmra.mxu0 %v432
    %v1965 = vpop.f32.mrf.mxu0
    %v1966 = vadd.f32 %v387, %v1965
    %v1967 = vpop.f32.mrf.mxu0
    %1968 = vdwg.mxu0
    %1969 = vmatpush.bf16.msra.mxu0 %v1188
    %1970 = vmatpush.bf16.msra.mxu0 %v1184
    %1971 = vmatpush.bf16.msra.mxu0 %v1180
    %1972 = vmatpush.bf16.msra.mxu0 %v1176
    %1973 = vmatpush.bf16.msra.mxu0 %v1172
    %1974 = vmatpush.bf16.msra.mxu0 %v1168
    %1975 = vmatpush.bf16.msra.mxu0 %v1164
    %1976 = vmatpush.bf16.msra.mxu0 %v1160
    %1977 = vmatmul.bf16.gmra.mxu0 %v426
    %v1978 = vpop.f32.mrf.mxu0
    %v1979 = vadd.f32 %v1961, %v1978
    %v1980 = vpop.f32.mrf.mxu0
    %v1981 = vadd.f32 %v1963, %v1980
    %1982 = vmatmul.bf16.gmra.mxu0 %v433
    %v1983 = vpop.f32.mrf.mxu0
    %v1984 = vadd.f32 %v1966, %v1983
    %v1985 = vpop.f32.mrf.mxu0
    %1986 = vdwg.mxu0
    %1987 = vmatpush.bf16.msra.mxu0 %v1220
    %1988 = vmatpush.bf16.msra.mxu0 %v1216
    %1989 = vmatpush.bf16.msra.mxu0 %v1212
    %1990 = vmatpush.bf16.msra.mxu0 %v1208
    %1991 = vmatpush.bf16.msra.mxu0 %v1204
    %1992 = vmatpush.bf16.msra.mxu0 %v1200
    %1993 = vmatpush.bf16.msra.mxu0 %v1196
    %1994 = vmatpush.bf16.msra.mxu0 %v1192
    %1995 = vmatmul.bf16.gmra.mxu0 %v427
    %v1996 = vpop.f32.mrf.mxu0
    %v1997 = vadd.f32 %v1979, %v1996
    %v1998 = vpop.f32.mrf.mxu0
    %v1999 = vadd.f32 %v1981, %v1998
    %2000 = vmatmul.bf16.gmra.mxu0 %v434
    %v2001 = vpop.f32.mrf.mxu0
    %v2002 = vadd.f32 %v1984, %v2001
    %v2003 = vpop.f32.mrf.mxu0
    %2004 = vdwg.mxu0
    %2005 = vmatpush.bf16.msra.mxu0 %v1252
    %2006 = vmatpush.bf16.msra.mxu0 %v1248
    %2007 = vmatpush.bf16.msra.mxu0 %v1244
    %2008 = vmatpush.bf16.msra.mxu0 %v1240
    %2009 = vmatpush.bf16.msra.mxu0 %v1236
    %2010 = vmatpush.bf16.msra.mxu0 %v1232
    %2011 = vmatpush.bf16.msra.mxu0 %v1228
    %2012 = vmatpush.bf16.msra.mxu0 %v1224
    %2013 = vmatmul.bf16.gmra.mxu0 %v428
    %v2014 = vpop.f32.mrf.mxu0
    %v2015 = vadd.f32 %v1997, %v2014
    %v2016 = vpop.f32.mrf.mxu0
    %v2017 = vadd.f32 %v1999, %v2016
    %2018 = vmatmul.bf16.gmra.mxu0 %v435
    %v2019 = vpop.f32.mrf.mxu0
    %v2020 = vadd.f32 %v2002, %v2019
    %v2021 = vpop.f32.mrf.mxu0
    %2022 = vdwg.mxu0
    %2023 = vmatpush.bf16.msra.mxu0 %v1284
    %2024 = vmatpush.bf16.msra.mxu0 %v1280
    %2025 = vmatpush.bf16.msra.mxu0 %v1276
    %2026 = vmatpush.bf16.msra.mxu0 %v1272
    %2027 = vmatpush.bf16.msra.mxu0 %v1268
    %2028 = vmatpush.bf16.msra.mxu0 %v1264
    %2029 = vmatpush.bf16.msra.mxu0 %v1260
    %2030 = vmatpush.bf16.msra.mxu0 %v1256
    %2031 = vmatmul.bf16.gmra.mxu0 %v429
    %v2032 = vpop.f32.mrf.mxu0
    %v2033 = vadd.f32 %v2015, %v2032
    %v2034 = vpop.f32.mrf.mxu0
    %v2035 = vadd.f32 %v2017, %v2034
    %2036 = vmatmul.bf16.gmra.mxu0 %v436
    %v2037 = vpop.f32.mrf.mxu0
    %v2038 = vadd.f32 %v2020, %v2037
    %v2039 = vpop.f32.mrf.mxu0
    %2040 = vdwg.mxu0
    %2041 = vmatpush.bf16.msra.mxu0 %v1316
    %2042 = vmatpush.bf16.msra.mxu0 %v1312
    %2043 = vmatpush.bf16.msra.mxu0 %v1308
    %2044 = vmatpush.bf16.msra.mxu0 %v1304
    %2045 = vmatpush.bf16.msra.mxu0 %v1300
    %2046 = vmatpush.bf16.msra.mxu0 %v1296
    %2047 = vmatpush.bf16.msra.mxu0 %v1292
    %2048 = vmatpush.bf16.msra.mxu0 %v1288
    %2049 = vmatmul.bf16.gmra.mxu0 %v430
    %v2050 = vpop.f32.mrf.mxu0
    %v2051 = vadd.f32 %v2033, %v2050
    %v2052 = vpop.f32.mrf.mxu0
    %v2053 = vadd.f32 %v2035, %v2052
    %2054 = vmatmul.bf16.gmra.mxu0 %v437
    %v2055 = vpop.f32.mrf.mxu0
    %v2056 = vadd.f32 %v2038, %v2055
    %v2057 = vpop.f32.mrf.mxu0
    %2058 = vdwg.mxu0
    %2059 = vmatpush.bf16.msra.mxu0 %v1348
    %2060 = vmatpush.bf16.msra.mxu0 %v1344
    %2061 = vmatpush.bf16.msra.mxu0 %v1340
    %2062 = vmatpush.bf16.msra.mxu0 %v1336
    %2063 = vmatpush.bf16.msra.mxu0 %v1332
    %2064 = vmatpush.bf16.msra.mxu0 %v1328
    %2065 = vmatpush.bf16.msra.mxu0 %v1324
    %2066 = vmatpush.bf16.msra.mxu0 %v1320
    %2067 = vmatmul.bf16.gmra.mxu0 %v431
    %v2068 = vpop.f32.mrf.mxu0
    %v2069 = vadd.f32 %v2051, %v2068
    %v2070 = vpop.f32.mrf.mxu0
    %v2071 = vadd.f32 %v2053, %v2070
    %2072 = vmatmul.bf16.gmra.mxu0 %v438
    %v2073 = vpop.f32.mrf.mxu0
    %v2074 = vadd.f32 %v2056, %v2073
    %v2075 = vpop.f32.mrf.mxu0
    %2076 = vdwg.mxu0
    %v2077 = vmax.f32 %v1691, 0.0
    %v2078 = vmax.f32 %v1817, 0.0
    %v2079 = vmax.f32 %v1943, 0.0
    %v2080 = vmax.f32 %v2069, 0.0
    %v2081 = vmax.f32 %v1693, 0.0
    %v2082 = vmax.f32 %v1819, 0.0
    %v2083 = vmax.f32 %v1945, 0.0
    %v2084 = vmax.f32 %v2071, 0.0
    %v2085 = vmax.f32 %v1696, 0.0
    %v2086 = vmax.f32 %v1822, 0.0
    %v2087 = vmax.f32 %v1948, 0.0
    %v2088 = vmax.f32 %v2074, 0.0
    %v2089 = vpack.c.bf16 %v2081, %v2077
    %v2090 = vpack.c.bf16 %v2082, %v2078
    %v2091 = vpack.c.bf16 %v2083, %v2079
    %v2092 = vpack.c.bf16 %v2084, %v2080
    %v2093 = vpack.c.bf16 %v2085, %v2085
    %v2094 = vpack.c.bf16 %v2086, %v2086
    %v2095 = vpack.c.bf16 %v2087, %v2087
    %v2096 = vpack.c.bf16 %v2088, %v2088
    %v2097 = vld [vmem:[#allocation8] sm:$0xff]
    %v2098 = vld [vmem:[#allocation8 + $0x8] sm:$0xff]
    %v2099 = vld [vmem:[#allocation8 + $0x10] sm:$0xff]
    %v2100 = vld [vmem:[#allocation8 + $0x18] sm:$0xff]
    %v2101 = vld [vmem:[#allocation8 + $0x20] sm:$0xff]
    %v2102 = vld [vmem:[#allocation8 + $0x28] sm:$0xff]
    %v2103 = vld [vmem:[#allocation8 + $0x30] sm:$0xff]
    %v2104 = vld [vmem:[#allocation8 + $0x38] sm:$0xff]
    %v2105 = vld [vmem:[#allocation8 + $0x40] sm:$0xff]
    %v2106 = vld [vmem:[#allocation8 + $0x48] sm:$0xff]
    %v2107 = vld [vmem:[#allocation8 + $0x50] sm:$0xff]
    %v2108 = vld [vmem:[#allocation8 + $0x58] sm:$0xff]
    %v2109 = vld [vmem:[#allocation8 + $0x60] sm:$0xff]
    %v2110 = vld [vmem:[#allocation8 + $0x68] sm:$0xff]
    %v2111 = vld [vmem:[#allocation8 + $0x70] sm:$0xff]
    %v2112 = vld [vmem:[#allocation8 + $0x78] sm:$0xff]
    %v2113 = vld [vmem:[#allocation8 + $0x80] sm:$0xff]
    %v2114 = vld [vmem:[#allocation8 + $0x88] sm:$0xff]
    %v2115 = vld [vmem:[#allocation8 + $0x90] sm:$0xff]
    %v2116 = vld [vmem:[#allocation8 + $0x98] sm:$0xff]
    %v2117 = vld [vmem:[#allocation8 + $0xa0] sm:$0xff]
    %v2118 = vld [vmem:[#allocation8 + $0xa8] sm:$0xff]
    %v2119 = vld [vmem:[#allocation8 + $0xb0] sm:$0xff]
    %v2120 = vld [vmem:[#allocation8 + $0xb8] sm:$0xff]
    %v2121 = vld [vmem:[#allocation8 + $0xc0] sm:$0xff]
    %v2122 = vld [vmem:[#allocation8 + $0xc8] sm:$0xff]
    %v2123 = vld [vmem:[#allocation8 + $0xd0] sm:$0xff]
    %v2124 = vld [vmem:[#allocation8 + $0xd8] sm:$0xff]
    %v2125 = vld [vmem:[#allocation8 + $0xe0] sm:$0xff]
    %v2126 = vld [vmem:[#allocation8 + $0xe8] sm:$0xff]
    %v2127 = vld [vmem:[#allocation8 + $0xf0] sm:$0xff]
    %v2128 = vld [vmem:[#allocation8 + $0xf8] sm:$0xff]
    %v2129 = vld [vmem:[#allocation8 + $0x100] sm:$0xff]
    %v2130 = vld [vmem:[#allocation8 + $0x108] sm:$0xff]
    %v2131 = vld [vmem:[#allocation8 + $0x110] sm:$0xff]
    %v2132 = vld [vmem:[#allocation8 + $0x118] sm:$0xff]
    %v2133 = vld [vmem:[#allocation8 + $0x120] sm:$0xff]
    %v2134 = vld [vmem:[#allocation8 + $0x128] sm:$0xff]
    %v2135 = vld [vmem:[#allocation8 + $0x130] sm:$0xff]
    %v2136 = vld [vmem:[#allocation8 + $0x138] sm:$0xff]
    %v2137 = vld [vmem:[#allocation8 + $0x140] sm:$0xff]
    %v2138 = vld [vmem:[#allocation8 + $0x148] sm:$0xff]
    %v2139 = vld [vmem:[#allocation8 + $0x150] sm:$0xff]
    %v2140 = vld [vmem:[#allocation8 + $0x158] sm:$0xff]
    %v2141 = vld [vmem:[#allocation8 + $0x160] sm:$0xff]
    %v2142 = vld [vmem:[#allocation8 + $0x168] sm:$0xff]
    %v2143 = vld [vmem:[#allocation8 + $0x170] sm:$0xff]
    %v2144 = vld [vmem:[#allocation8 + $0x178] sm:$0xff]
    %v2145 = vld [vmem:[#allocation8 + $0x180] sm:$0xff]
    %v2146 = vld [vmem:[#allocation8 + $0x188] sm:$0xff]
    %v2147 = vld [vmem:[#allocation8 + $0x190] sm:$0xff]
    %v2148 = vld [vmem:[#allocation8 + $0x198] sm:$0xff]
    %v2149 = vld [vmem:[#allocation8 + $0x1a0] sm:$0xff]
    %v2150 = vld [vmem:[#allocation8 + $0x1a8] sm:$0xff]
    %v2151 = vld [vmem:[#allocation8 + $0x1b0] sm:$0xff]
    %v2152 = vld [vmem:[#allocation8 + $0x1b8] sm:$0xff]
    %v2153 = vld [vmem:[#allocation8 + $0x1c0] sm:$0xff]
    %v2154 = vld [vmem:[#allocation8 + $0x1c8] sm:$0xff]
    %v2155 = vld [vmem:[#allocation8 + $0x1d0] sm:$0xff]
    %v2156 = vld [vmem:[#allocation8 + $0x1d8] sm:$0xff]
    %v2157 = vld [vmem:[#allocation8 + $0x1e0] sm:$0xff]
    %v2158 = vld [vmem:[#allocation8 + $0x1e8] sm:$0xff]
    %v2159 = vld [vmem:[#allocation8 + $0x1f0] sm:$0xff]
    %v2160 = vld [vmem:[#allocation8 + $0x1f8] sm:$0xff]
    %v2161 = vld [vmem:[%s4] sm:$0x3]
    %v2163 = vperm.slane %v2161, 0
    %v2164 = vperm.slane %v2161, 1
    %v2231 = vunpack.c.l.b16 %v2097
    %v2232 = vunpack.c.h.b16 %v2097
    %v2233 = vunpack.c.l.b16 %v2098
    %v2234 = vunpack.c.h.b16 %v2098
    %v2235 = vunpack.c.l.b16 %v2099
    %v2236 = vunpack.c.h.b16 %v2099
    %v2237 = vunpack.c.l.b16 %v2100
    %v2238 = vunpack.c.h.b16 %v2100
    %v2239 = vunpack.c.l.b16 %v2101
    %v2240 = vunpack.c.h.b16 %v2101
    %v2241 = vunpack.c.l.b16 %v2102
    %v2242 = vunpack.c.h.b16 %v2102
    %v2243 = vunpack.c.l.b16 %v2103
    %v2244 = vunpack.c.h.b16 %v2103
    %v2245 = vunpack.c.l.b16 %v2104
    %v2246 = vunpack.c.h.b16 %v2104
    %v2247 = vunpack.c.l.b16 %v2105
    %v2248 = vunpack.c.h.b16 %v2105
    %v2249 = vunpack.c.l.b16 %v2106
    %v2250 = vunpack.c.h.b16 %v2106
    %v2251 = vunpack.c.l.b16 %v2107
    %v2252 = vunpack.c.h.b16 %v2107
    %v2253 = vunpack.c.l.b16 %v2108
    %v2254 = vunpack.c.h.b16 %v2108
    %v2255 = vunpack.c.l.b16 %v2109
    %v2256 = vunpack.c.h.b16 %v2109
    %v2257 = vunpack.c.l.b16 %v2110
    %v2258 = vunpack.c.h.b16 %v2110
    %v2259 = vunpack.c.l.b16 %v2111
    %v2260 = vunpack.c.h.b16 %v2111
    %v2261 = vunpack.c.l.b16 %v2112
    %v2262 = vunpack.c.h.b16 %v2112
    %v2263 = vunpack.c.l.b16 %v2113
    %v2264 = vunpack.c.h.b16 %v2113
    %v2265 = vunpack.c.l.b16 %v2114
    %v2266 = vunpack.c.h.b16 %v2114
    %v2267 = vunpack.c.l.b16 %v2115
    %v2268 = vunpack.c.h.b16 %v2115
    %v2269 = vunpack.c.l.b16 %v2116
    %v2270 = vunpack.c.h.b16 %v2116
    %v2271 = vunpack.c.l.b16 %v2117
    %v2272 = vunpack.c.h.b16 %v2117
    %v2273 = vunpack.c.l.b16 %v2118
    %v2274 = vunpack.c.h.b16 %v2118
    %v2275 = vunpack.c.l.b16 %v2119
    %v2276 = vunpack.c.h.b16 %v2119
    %v2277 = vunpack.c.l.b16 %v2120
    %v2278 = vunpack.c.h.b16 %v2120
    %v2279 = vunpack.c.l.b16 %v2121
    %v2280 = vunpack.c.h.b16 %v2121
    %v2281 = vunpack.c.l.b16 %v2122
    %v2282 = vunpack.c.h.b16 %v2122
    %v2283 = vunpack.c.l.b16 %v2123
    %v2284 = vunpack.c.h.b16 %v2123
    %v2285 = vunpack.c.l.b16 %v2124
    %v2286 = vunpack.c.h.b16 %v2124
    %v2287 = vunpack.c.l.b16 %v2125
    %v2288 = vunpack.c.h.b16 %v2125
    %v2289 = vunpack.c.l.b16 %v2126
    %v2290 = vunpack.c.h.b16 %v2126
    %v2291 = vunpack.c.l.b16 %v2127
    %v2292 = vunpack.c.h.b16 %v2127
    %v2293 = vunpack.c.l.b16 %v2128
    %v2294 = vunpack.c.h.b16 %v2128
    %v2295 = vunpack.c.l.b16 %v2129
    %v2296 = vunpack.c.h.b16 %v2129
    %v2297 = vunpack.c.l.b16 %v2130
    %v2298 = vunpack.c.h.b16 %v2130
    %v2299 = vunpack.c.l.b16 %v2131
    %v2300 = vunpack.c.h.b16 %v2131
    %v2301 = vunpack.c.l.b16 %v2132
    %v2302 = vunpack.c.h.b16 %v2132
    %v2303 = vunpack.c.l.b16 %v2133
    %v2304 = vunpack.c.h.b16 %v2133
    %v2305 = vunpack.c.l.b16 %v2134
    %v2306 = vunpack.c.h.b16 %v2134
    %v2307 = vunpack.c.l.b16 %v2135
    %v2308 = vunpack.c.h.b16 %v2135
    %v2309 = vunpack.c.l.b16 %v2136
    %v2310 = vunpack.c.h.b16 %v2136
    %v2311 = vunpack.c.l.b16 %v2137
    %v2312 = vunpack.c.h.b16 %v2137
    %v2313 = vunpack.c.l.b16 %v2138
    %v2314 = vunpack.c.h.b16 %v2138
    %v2315 = vunpack.c.l.b16 %v2139
    %v2316 = vunpack.c.h.b16 %v2139
    %v2317 = vunpack.c.l.b16 %v2140
    %v2318 = vunpack.c.h.b16 %v2140
    %v2319 = vunpack.c.l.b16 %v2141
    %v2320 = vunpack.c.h.b16 %v2141
    %v2321 = vunpack.c.l.b16 %v2142
    %v2322 = vunpack.c.h.b16 %v2142
    %v2323 = vunpack.c.l.b16 %v2143
    %v2324 = vunpack.c.h.b16 %v2143
    %v2325 = vunpack.c.l.b16 %v2144
    %v2326 = vunpack.c.h.b16 %v2144
    %v2327 = vunpack.c.l.b16 %v2145
    %v2328 = vunpack.c.h.b16 %v2145
    %v2329 = vunpack.c.l.b16 %v2146
    %v2330 = vunpack.c.h.b16 %v2146
    %v2331 = vunpack.c.l.b16 %v2147
    %v2332 = vunpack.c.h.b16 %v2147
    %v2333 = vunpack.c.l.b16 %v2148
    %v2334 = vunpack.c.h.b16 %v2148
    %v2335 = vunpack.c.l.b16 %v2149
    %v2336 = vunpack.c.h.b16 %v2149
    %v2337 = vunpack.c.l.b16 %v2150
    %v2338 = vunpack.c.h.b16 %v2150
    %v2339 = vunpack.c.l.b16 %v2151
    %v2340 = vunpack.c.h.b16 %v2151
    %v2341 = vunpack.c.l.b16 %v2152
    %v2342 = vunpack.c.h.b16 %v2152
    %v2343 = vunpack.c.l.b16 %v2153
    %v2344 = vunpack.c.h.b16 %v2153
    %v2345 = vunpack.c.l.b16 %v2154
    %v2346 = vunpack.c.h.b16 %v2154
    %v2347 = vunpack.c.l.b16 %v2155
    %v2348 = vunpack.c.h.b16 %v2155
    %v2349 = vunpack.c.l.b16 %v2156
    %v2350 = vunpack.c.h.b16 %v2156
    %v2351 = vunpack.c.l.b16 %v2157
    %v2352 = vunpack.c.h.b16 %v2157
    %v2353 = vunpack.c.l.b16 %v2158
    %v2354 = vunpack.c.h.b16 %v2158
    %v2355 = vunpack.c.l.b16 %v2159
    %v2356 = vunpack.c.h.b16 %v2159
    %v2357 = vunpack.c.l.b16 %v2160
    %v2358 = vunpack.c.h.b16 %v2160
    %v2359 = vpack.c.b16 %v2233, %v2231
    %v2360 = vpack.c.b16 %v2234, %v2232
    %v2361 = vpack.c.b16 %v2237, %v2235
    %v2362 = vpack.c.b16 %v2238, %v2236
    %v2363 = vpack.c.b16 %v2241, %v2239
    %v2364 = vpack.c.b16 %v2242, %v2240
    %v2365 = vpack.c.b16 %v2245, %v2243
    %v2366 = vpack.c.b16 %v2246, %v2244
    %v2367 = vpack.c.b16 %v2249, %v2247
    %v2368 = vpack.c.b16 %v2250, %v2248
    %v2369 = vpack.c.b16 %v2253, %v2251
    %v2370 = vpack.c.b16 %v2254, %v2252
    %v2371 = vpack.c.b16 %v2257, %v2255
    %v2372 = vpack.c.b16 %v2258, %v2256
    %v2373 = vpack.c.b16 %v2261, %v2259
    %v2374 = vpack.c.b16 %v2262, %v2260
    %v2375 = vpack.c.b16 %v2265, %v2263
    %v2376 = vpack.c.b16 %v2266, %v2264
    %v2377 = vpack.c.b16 %v2269, %v2267
    %v2378 = vpack.c.b16 %v2270, %v2268
    %v2379 = vpack.c.b16 %v2273, %v2271
    %v2380 = vpack.c.b16 %v2274, %v2272
    %v2381 = vpack.c.b16 %v2277, %v2275
    %v2382 = vpack.c.b16 %v2278, %v2276
    %v2383 = vpack.c.b16 %v2281, %v2279
    %v2384 = vpack.c.b16 %v2282, %v2280
    %v2385 = vpack.c.b16 %v2285, %v2283
    %v2386 = vpack.c.b16 %v2286, %v2284
    %v2387 = vpack.c.b16 %v2289, %v2287
    %v2388 = vpack.c.b16 %v2290, %v2288
    %v2389 = vpack.c.b16 %v2293, %v2291
    %v2390 = vpack.c.b16 %v2294, %v2292
    %v2391 = vpack.c.b16 %v2297, %v2295
    %v2392 = vpack.c.b16 %v2298, %v2296
    %v2393 = vpack.c.b16 %v2301, %v2299
    %v2394 = vpack.c.b16 %v2302, %v2300
    %v2395 = vpack.c.b16 %v2305, %v2303
    %v2396 = vpack.c.b16 %v2306, %v2304
    %v2397 = vpack.c.b16 %v2309, %v2307
    %v2398 = vpack.c.b16 %v2310, %v2308
    %v2399 = vpack.c.b16 %v2313, %v2311
    %v2400 = vpack.c.b16 %v2314, %v2312
    %v2401 = vpack.c.b16 %v2317, %v2315
    %v2402 = vpack.c.b16 %v2318, %v2316
    %v2403 = vpack.c.b16 %v2321, %v2319
    %v2404 = vpack.c.b16 %v2322, %v2320
    %v2405 = vpack.c.b16 %v2325, %v2323
    %v2406 = vpack.c.b16 %v2326, %v2324
    %v2407 = vpack.c.b16 %v2329, %v2327
    %v2408 = vpack.c.b16 %v2330, %v2328
    %v2409 = vpack.c.b16 %v2333, %v2331
    %v2410 = vpack.c.b16 %v2334, %v2332
    %v2411 = vpack.c.b16 %v2337, %v2335
    %v2412 = vpack.c.b16 %v2338, %v2336
    %v2413 = vpack.c.b16 %v2341, %v2339
    %v2414 = vpack.c.b16 %v2342, %v2340
    %v2415 = vpack.c.b16 %v2345, %v2343
    %v2416 = vpack.c.b16 %v2346, %v2344
    %v2417 = vpack.c.b16 %v2349, %v2347
    %v2418 = vpack.c.b16 %v2350, %v2348
    %v2419 = vpack.c.b16 %v2353, %v2351
    %v2420 = vpack.c.b16 %v2354, %v2352
    %v2421 = vpack.c.b16 %v2357, %v2355
    %v2422 = vpack.c.b16 %v2358, %v2356
    %2487 = vmatpush.bf16.msra.mxu0 %v2373
    %2488 = vmatpush.bf16.msra.mxu0 %v2371
    %2489 = vmatpush.bf16.msra.mxu0 %v2369
    %2490 = vmatpush.bf16.msra.mxu0 %v2367
    %2491 = vmatpush.bf16.msra.mxu0 %v2365
    %2492 = vmatpush.bf16.msra.mxu0 %v2363
    %2493 = vmatpush.bf16.msra.mxu0 %v2361
    %2494 = vmatpush.bf16.msra.mxu0 %v2359
    %2495 = vmatmul.bf16.gmra.mxu0 %v2089
    %v2496 = vpop.f32.mrf.mxu0
    %v2497 = vadd.f32 %v2163, %v2496
    %v2498 = vpop.f32.mrf.mxu0
    %v2499 = vadd.f32 %v2163, %v2498
    %2500 = vmatmul.bf16.gmra.mxu0 %v2093
    %v2501 = vpop.f32.mrf.mxu0
    %v2502 = vadd.f32 %v2163, %v2501
    %v2503 = vpop.f32.mrf.mxu0
    %2504 = vdwg.mxu0
    %2505 = vmatpush.bf16.msra.mxu0 %v2389
    %2506 = vmatpush.bf16.msra.mxu0 %v2387
    %2507 = vmatpush.bf16.msra.mxu0 %v2385
    %2508 = vmatpush.bf16.msra.mxu0 %v2383
    %2509 = vmatpush.bf16.msra.mxu0 %v2381
    %2510 = vmatpush.bf16.msra.mxu0 %v2379
    %2511 = vmatpush.bf16.msra.mxu0 %v2377
    %2512 = vmatpush.bf16.msra.mxu0 %v2375
    %2513 = vmatmul.bf16.gmra.mxu0 %v2090
    %v2514 = vpop.f32.mrf.mxu0
    %v2515 = vadd.f32 %v2497, %v2514
    %v2516 = vpop.f32.mrf.mxu0
    %v2517 = vadd.f32 %v2499, %v2516
    %2518 = vmatmul.bf16.gmra.mxu0 %v2094
    %v2519 = vpop.f32.mrf.mxu0
    %v2520 = vadd.f32 %v2502, %v2519
    %v2521 = vpop.f32.mrf.mxu0
    %2522 = vdwg.mxu0
    %2523 = vmatpush.bf16.msra.mxu0 %v2405
    %2524 = vmatpush.bf16.msra.mxu0 %v2403
    %2525 = vmatpush.bf16.msra.mxu0 %v2401
    %2526 = vmatpush.bf16.msra.mxu0 %v2399
    %2527 = vmatpush.bf16.msra.mxu0 %v2397
    %2528 = vmatpush.bf16.msra.mxu0 %v2395
    %2529 = vmatpush.bf16.msra.mxu0 %v2393
    %2530 = vmatpush.bf16.msra.mxu0 %v2391
    %2531 = vmatmul.bf16.gmra.mxu0 %v2091
    %v2532 = vpop.f32.mrf.mxu0
    %v2533 = vadd.f32 %v2515, %v2532
    %v2534 = vpop.f32.mrf.mxu0
    %v2535 = vadd.f32 %v2517, %v2534
    %2536 = vmatmul.bf16.gmra.mxu0 %v2095
    %v2537 = vpop.f32.mrf.mxu0
    %v2538 = vadd.f32 %v2520, %v2537
    %v2539 = vpop.f32.mrf.mxu0
    %2540 = vdwg.mxu0
    %2541 = vmatpush.bf16.msra.mxu0 %v2421
    %2542 = vmatpush.bf16.msra.mxu0 %v2419
    %2543 = vmatpush.bf16.msra.mxu0 %v2417
    %2544 = vmatpush.bf16.msra.mxu0 %v2415
    %2545 = vmatpush.bf16.msra.mxu0 %v2413
    %2546 = vmatpush.bf16.msra.mxu0 %v2411
    %2547 = vmatpush.bf16.msra.mxu0 %v2409
    %2548 = vmatpush.bf16.msra.mxu0 %v2407
    %2549 = vmatmul.bf16.gmra.mxu0 %v2092
    %v2550 = vpop.f32.mrf.mxu0
    %v2551 = vadd.f32 %v2533, %v2550
    %v2552 = vpop.f32.mrf.mxu0
    %v2553 = vadd.f32 %v2535, %v2552
    %2554 = vmatmul.bf16.gmra.mxu0 %v2096
    %v2555 = vpop.f32.mrf.mxu0
    %v2556 = vadd.f32 %v2538, %v2555
    %v2557 = vpop.f32.mrf.mxu0
    %2558 = vdwg.mxu0
    %2559 = vmatpush.bf16.msra.mxu0 %v2374
    %2560 = vmatpush.bf16.msra.mxu0 %v2372
    %2561 = vmatpush.bf16.msra.mxu0 %v2370
    %2562 = vmatpush.bf16.msra.mxu0 %v2368
    %2563 = vmatpush.bf16.msra.mxu0 %v2366
    %2564 = vmatpush.bf16.msra.mxu0 %v2364
    %2565 = vmatpush.bf16.msra.mxu0 %v2362
    %2566 = vmatpush.bf16.msra.mxu0 %v2360
    %2567 = vmatmul.bf16.gmra.mxu0 %v2089
    %v2568 = vpop.f32.mrf.mxu0
    %v2569 = vadd.f32 %v2164, %v2568
    %v2570 = vpop.f32.mrf.mxu0
    %v2571 = vadd.f32 %v2164, %v2570
    %2572 = vmatmul.bf16.gmra.mxu0 %v2093
    %v2573 = vpop.f32.mrf.mxu0
    %v2574 = vadd.f32 %v2164, %v2573
    %v2575 = vpop.f32.mrf.mxu0
    %2576 = vdwg.mxu0
    %2577 = vmatpush.bf16.msra.mxu0 %v2390
    %2578 = vmatpush.bf16.msra.mxu0 %v2388
    %2579 = vmatpush.bf16.msra.mxu0 %v2386
    %2580 = vmatpush.bf16.msra.mxu0 %v2384
    %2581 = vmatpush.bf16.msra.mxu0 %v2382
    %2582 = vmatpush.bf16.msra.mxu0 %v2380
    %2583 = vmatpush.bf16.msra.mxu0 %v2378
    %2584 = vmatpush.bf16.msra.mxu0 %v2376
    %2585 = vmatmul.bf16.gmra.mxu0 %v2090
    %v2586 = vpop.f32.mrf.mxu0
    %v2587 = vadd.f32 %v2569, %v2586
    %v2588 = vpop.f32.mrf.mxu0
    %v2589 = vadd.f32 %v2571, %v2588
    %2590 = vmatmul.bf16.gmra.mxu0 %v2094
    %v2591 = vpop.f32.mrf.mxu0
    %v2592 = vadd.f32 %v2574, %v2591
    %v2593 = vpop.f32.mrf.mxu0
    %2594 = vdwg.mxu0
    %2595 = vmatpush.bf16.msra.mxu0 %v2406
    %2596 = vmatpush.bf16.msra.mxu0 %v2404
    %2597 = vmatpush.bf16.msra.mxu0 %v2402
    %2598 = vmatpush.bf16.msra.mxu0 %v2400
    %2599 = vmatpush.bf16.msra.mxu0 %v2398
    %2600 = vmatpush.bf16.msra.mxu0 %v2396
    %2601 = vmatpush.bf16.msra.mxu0 %v2394
    %2602 = vmatpush.bf16.msra.mxu0 %v2392
    %2603 = vmatmul.bf16.gmra.mxu0 %v2091
    %v2604 = vpop.f32.mrf.mxu0
    %v2605 = vadd.f32 %v2587, %v2604
    %v2606 = vpop.f32.mrf.mxu0
    %v2607 = vadd.f32 %v2589, %v2606
    %2608 = vmatmul.bf16.gmra.mxu0 %v2095
    %v2609 = vpop.f32.mrf.mxu0
    %v2610 = vadd.f32 %v2592, %v2609
    %v2611 = vpop.f32.mrf.mxu0
    %2612 = vdwg.mxu0
    %2613 = vmatpush.bf16.msra.mxu0 %v2422
    %2614 = vmatpush.bf16.msra.mxu0 %v2420
    %2615 = vmatpush.bf16.msra.mxu0 %v2418
    %2616 = vmatpush.bf16.msra.mxu0 %v2416
    %2617 = vmatpush.bf16.msra.mxu0 %v2414
    %2618 = vmatpush.bf16.msra.mxu0 %v2412
    %2619 = vmatpush.bf16.msra.mxu0 %v2410
    %2620 = vmatpush.bf16.msra.mxu0 %v2408
    %2621 = vmatmul.bf16.gmra.mxu0 %v2092
    %v2622 = vpop.f32.mrf.mxu0
    %v2623 = vadd.f32 %v2605, %v2622
    %v2624 = vpop.f32.mrf.mxu0
    %v2625 = vadd.f32 %v2607, %v2624
    %2626 = vmatmul.bf16.gmra.mxu0 %v2096
    %v2627 = vpop.f32.mrf.mxu0
    %v2628 = vadd.f32 %v2610, %v2627
    %v2629 = vpop.f32.mrf.mxu0
    %2630 = vdwg.mxu0
    %v2631 = vmax.f32 %v2551, 0.0
    %v2632 = vmax.f32 %v2623, 0.0
    %v2633 = vmax.f32 %v2553, 0.0
    %v2634 = vmax.f32 %v2625, 0.0
    %v2635 = vmax.f32 %v2556, 0.0
    %v2636 = vmax.f32 %v2628, 0.0
    %v2637 = vpack.c.bf16 %v2633, %v2631
    %v2638 = vpack.c.bf16 %v2634, %v2632
    %v2639 = vpack.c.bf16 %v2635, %v2635
    %v2640 = vpack.c.bf16 %v2636, %v2636
    %v2641 = vld [vmem:[#allocation10] sm:$0xf]
    %v2642 = vld [vmem:[#allocation10 + $0x4] sm:$0xf]
    %v2643 = vld [vmem:[#allocation10 + $0x8] sm:$0xf]
    %v2644 = vld [vmem:[#allocation10 + $0xc] sm:$0xf]
    %v2645 = vld [vmem:[#allocation10 + $0x10] sm:$0xf]
    %v2646 = vld [vmem:[#allocation10 + $0x14] sm:$0xf]
    %v2647 = vld [vmem:[#allocation10 + $0x18] sm:$0xf]
    %v2648 = vld [vmem:[#allocation10 + $0x1c] sm:$0xf]
    %v2649 = vld [vmem:[#allocation10 + $0x20] sm:$0xf]
    %v2650 = vld [vmem:[#allocation10 + $0x24] sm:$0xf]
    %v2651 = vld [vmem:[#allocation10 + $0x28] sm:$0xf]
    %v2652 = vld [vmem:[#allocation10 + $0x2c] sm:$0xf]
    %v2653 = vld [vmem:[#allocation10 + $0x30] sm:$0xf]
    %v2654 = vld [vmem:[#allocation10 + $0x34] sm:$0xf]
    %v2655 = vld [vmem:[#allocation10 + $0x38] sm:$0xf]
    %v2656 = vld [vmem:[#allocation10 + $0x3c] sm:$0xf]
    %v2657 = vld [vmem:[#allocation10 + $0x40] sm:$0xf]
    %v2658 = vld [vmem:[#allocation10 + $0x44] sm:$0xf]
    %v2659 = vld [vmem:[#allocation10 + $0x48] sm:$0xf]
    %v2660 = vld [vmem:[#allocation10 + $0x4c] sm:$0xf]
    %v2661 = vld [vmem:[#allocation10 + $0x50] sm:$0xf]
    %v2662 = vld [vmem:[#allocation10 + $0x54] sm:$0xf]
    %v2663 = vld [vmem:[#allocation10 + $0x58] sm:$0xf]
    %v2664 = vld [vmem:[#allocation10 + $0x5c] sm:$0xf]
    %v2665 = vld [vmem:[#allocation10 + $0x60] sm:$0xf]
    %v2666 = vld [vmem:[#allocation10 + $0x64] sm:$0xf]
    %v2667 = vld [vmem:[#allocation10 + $0x68] sm:$0xf]
    %v2668 = vld [vmem:[#allocation10 + $0x6c] sm:$0xf]
    %v2669 = vld [vmem:[#allocation10 + $0x70] sm:$0xf]
    %v2670 = vld [vmem:[#allocation10 + $0x74] sm:$0xf]
    %v2671 = vld [vmem:[#allocation10 + $0x78] sm:$0xf]
    %v2672 = vld [vmem:[#allocation10 + $0x7c] sm:$0xf]
    %v2673 = vld [vmem:[%s6] sm:$0x1]
    %v2675 = vperm.slane %v2673, 0
    %v2709 = vunpack.c.l.b16 %v2641
    %v2710 = vunpack.c.l.b16 %v2642
    %v2711 = vunpack.c.l.b16 %v2643
    %v2712 = vunpack.c.l.b16 %v2644
    %v2713 = vunpack.c.l.b16 %v2645
    %v2714 = vunpack.c.l.b16 %v2646
    %v2715 = vunpack.c.l.b16 %v2647
    %v2716 = vunpack.c.l.b16 %v2648
    %v2717 = vunpack.c.l.b16 %v2649
    %v2718 = vunpack.c.l.b16 %v2650
    %v2719 = vunpack.c.l.b16 %v2651
    %v2720 = vunpack.c.l.b16 %v2652
    %v2721 = vunpack.c.l.b16 %v2653
    %v2722 = vunpack.c.l.b16 %v2654
    %v2723 = vunpack.c.l.b16 %v2655
    %v2724 = vunpack.c.l.b16 %v2656
    %v2725 = vunpack.c.l.b16 %v2657
    %v2726 = vunpack.c.l.b16 %v2658
    %v2727 = vunpack.c.l.b16 %v2659
    %v2728 = vunpack.c.l.b16 %v2660
    %v2729 = vunpack.c.l.b16 %v2661
    %v2730 = vunpack.c.l.b16 %v2662
    %v2731 = vunpack.c.l.b16 %v2663
    %v2732 = vunpack.c.l.b16 %v2664
    %v2733 = vunpack.c.l.b16 %v2665
    %v2734 = vunpack.c.l.b16 %v2666
    %v2735 = vunpack.c.l.b16 %v2667
    %v2736 = vunpack.c.l.b16 %v2668
    %v2737 = vunpack.c.l.b16 %v2669
    %v2738 = vunpack.c.l.b16 %v2670
    %v2739 = vunpack.c.l.b16 %v2671
    %v2740 = vunpack.c.l.b16 %v2672
    %v2741 = vpack.c.b16 %v2710, %v2709
    %v2742 = vpack.c.b16 %v2712, %v2711
    %v2743 = vpack.c.b16 %v2714, %v2713
    %v2744 = vpack.c.b16 %v2716, %v2715
    %v2745 = vpack.c.b16 %v2718, %v2717
    %v2746 = vpack.c.b16 %v2720, %v2719
    %v2747 = vpack.c.b16 %v2722, %v2721
    %v2748 = vpack.c.b16 %v2724, %v2723
    %v2749 = vpack.c.b16 %v2726, %v2725
    %v2750 = vpack.c.b16 %v2728, %v2727
    %v2751 = vpack.c.b16 %v2730, %v2729
    %v2752 = vpack.c.b16 %v2732, %v2731
    %v2753 = vpack.c.b16 %v2734, %v2733
    %v2754 = vpack.c.b16 %v2736, %v2735
    %v2755 = vpack.c.b16 %v2738, %v2737
    %v2756 = vpack.c.b16 %v2740, %v2739
    %2773 = vmatpush.bf16.msra.mxu0 %v2748
    %2774 = vmatpush.bf16.msra.mxu0 %v2747
    %2775 = vmatpush.bf16.msra.mxu0 %v2746
    %2776 = vmatpush.bf16.msra.mxu0 %v2745
    %2777 = vmatpush.bf16.msra.mxu0 %v2744
    %2778 = vmatpush.bf16.msra.mxu0 %v2743
    %2779 = vmatpush.bf16.msra.mxu0 %v2742
    %2780 = vmatpush.bf16.msra.mxu0 %v2741
    %2781 = vmatmul.bf16.gmra.mxu0 %v2637
    %v2782 = vpop.f32.mrf.mxu0
    %v2783 = vadd.f32 %v2675, %v2782
    %v2784 = vpop.f32.mrf.mxu0
    %v2785 = vadd.f32 %v2675, %v2784
    %2786 = vmatmul.bf16.gmra.mxu0 %v2639
    %v2787 = vpop.f32.mrf.mxu0
    %v2788 = vadd.f32 %v2675, %v2787
    %v2789 = vpop.f32.mrf.mxu0
    %2790 = vdwg.mxu0
    %2791 = vmatpush.bf16.msra.mxu0 %v2756
    %2792 = vmatpush.bf16.msra.mxu0 %v2755
    %2793 = vmatpush.bf16.msra.mxu0 %v2754
    %2794 = vmatpush.bf16.msra.mxu0 %v2753
    %2795 = vmatpush.bf16.msra.mxu0 %v2752
    %2796 = vmatpush.bf16.msra.mxu0 %v2751
    %2797 = vmatpush.bf16.msra.mxu0 %v2750
    %2798 = vmatpush.bf16.msra.mxu0 %v2749
    %2799 = vmatmul.bf16.gmra.mxu0 %v2638
    %v2800 = vpop.f32.mrf.mxu0
    %v2801 = vadd.f32 %v2783, %v2800
    %v2802 = vpop.f32.mrf.mxu0
    %v2803 = vadd.f32 %v2785, %v2802
    %2804 = vmatmul.bf16.gmra.mxu0 %v2640
    %v2805 = vpop.f32.mrf.mxu0
    %v2806 = vadd.f32 %v2788, %v2805
    %v2807 = vpop.f32.mrf.mxu0
    %2808 = vdwg.mxu0
    %v2809 = vmax.f32 %v2801, 0.0
    %v2810 = vmax.f32 %v2803, 0.0
    %v2811 = vmax.f32 %v2806, 0.0
    %v2812 = vpack.c.bf16 %v2810, %v2809
    %v2813 = vpack.c.bf16 %v2811, %v2811
    %v2814 = vld [vmem:[#allocation11] sm:$0xf]
    %v2815 = vld [vmem:[#allocation11 + $0x4] sm:$0xf]
    %v2816 = vld [vmem:[#allocation11 + $0x8] sm:$0xf]
    %v2817 = vld [vmem:[#allocation11 + $0xc] sm:$0xf]
    %v2818 = vld [vmem:[#allocation11 + $0x10] sm:$0xf]
    %v2819 = vld [vmem:[#allocation11 + $0x14] sm:$0xf]
    %v2820 = vld [vmem:[#allocation11 + $0x18] sm:$0xf]
    %v2821 = vld [vmem:[#allocation11 + $0x1c] sm:$0xf]
    %v2822 = vld [vmem:[#allocation11 + $0x20] sm:$0xf]
    %v2823 = vld [vmem:[#allocation11 + $0x24] sm:$0xf]
    %v2824 = vld [vmem:[#allocation11 + $0x28] sm:$0xf]
    %v2825 = vld [vmem:[#allocation11 + $0x2c] sm:$0xf]
    %v2826 = vld [vmem:[#allocation11 + $0x30] sm:$0xf]
    %v2827 = vld [vmem:[#allocation11 + $0x34] sm:$0xf]
    %v2828 = vld [vmem:[#allocation11 + $0x38] sm:$0xf]
    %v2829 = vld [vmem:[#allocation11 + $0x3c] sm:$0xf]
    %v2830 = vld [vmem:[%s8] sm:$0x1]
    %v2832 = vperm.slane %v2830, 0
    %v2850 = vunpack.c.l.b16 %v2814
    %v2851 = vunpack.c.l.b16 %v2815
    %v2852 = vunpack.c.l.b16 %v2816
    %v2853 = vunpack.c.l.b16 %v2817
    %v2854 = vunpack.c.l.b16 %v2818
    %v2855 = vunpack.c.l.b16 %v2819
    %v2856 = vunpack.c.l.b16 %v2820
    %v2857 = vunpack.c.l.b16 %v2821
    %v2858 = vunpack.c.l.b16 %v2822
    %v2859 = vunpack.c.l.b16 %v2823
    %v2860 = vunpack.c.l.b16 %v2824
    %v2861 = vunpack.c.l.b16 %v2825
    %v2862 = vunpack.c.l.b16 %v2826
    %v2863 = vunpack.c.l.b16 %v2827
    %v2864 = vunpack.c.l.b16 %v2828
    %v2865 = vunpack.c.l.b16 %v2829
    %v2866 = vpack.c.b16 %v2851, %v2850
    %v2867 = vpack.c.b16 %v2853, %v2852
    %v2868 = vpack.c.b16 %v2855, %v2854
    %v2869 = vpack.c.b16 %v2857, %v2856
    %v2870 = vpack.c.b16 %v2859, %v2858
    %v2871 = vpack.c.b16 %v2861, %v2860
    %v2872 = vpack.c.b16 %v2863, %v2862
    %v2873 = vpack.c.b16 %v2865, %v2864
    %2882 = vmatpush.bf16.msra.mxu0 %v2873
    %2883 = vmatpush.bf16.msra.mxu0 %v2872
    %2884 = vmatpush.bf16.msra.mxu0 %v2871
    %2885 = vmatpush.bf16.msra.mxu0 %v2870
    %2886 = vmatpush.bf16.msra.mxu0 %v2869
    %2887 = vmatpush.bf16.msra.mxu0 %v2868
    %2888 = vmatpush.bf16.msra.mxu0 %v2867
    %2889 = vmatpush.bf16.msra.mxu0 %v2866
    %2890 = vmatmul.bf16.gmra.mxu0 %v2812
    %v2891 = vpop.f32.mrf.mxu0
    %v2892 = vadd.f32 %v2832, %v2891
    %v2893 = vpop.f32.mrf.mxu0
    %v2894 = vadd.f32 %v2832, %v2893
    %2895 = vmatmul.bf16.gmra.mxu0 %v2813
    %v2896 = vpop.f32.mrf.mxu0
    %v2897 = vadd.f32 %v2832, %v2896
    %v2898 = vpop.f32.mrf.mxu0
    %2899 = vdwg.mxu0
    %v2900 = vmax.f32 %v2892, 0.0
    %v2901 = vmax.f32 %v2894, 0.0
    %v2902 = vmax.f32 %v2897, 0.0
    %v2903 = vpack.c.bf16 %v2901, %v2900
    %v2904 = vpack.c.bf16 %v2902, %v2902
    %v2905 = vld [vmem:[#allocation13] sm:$0xf]
    %v2906 = vld [vmem:[#allocation13 + $0x4] sm:$0xf]
    %v2907 = vld [vmem:[#allocation13 + $0x8] sm:$0xf]
    %v2908 = vld [vmem:[#allocation13 + $0xc] sm:$0xf]
    %v2909 = vld [vmem:[#allocation13 + $0x10] sm:$0xf]
    %v2910 = vld [vmem:[#allocation13 + $0x14] sm:$0xf]
    %v2911 = vld [vmem:[#allocation13 + $0x18] sm:$0xf]
    %v2912 = vld [vmem:[#allocation13 + $0x1c] sm:$0xf]
    %v2913 = vld [vmem:[#allocation13 + $0x20] sm:$0xf]
    %v2914 = vld [vmem:[#allocation13 + $0x24] sm:$0xf]
    %v2915 = vld [vmem:[#allocation13 + $0x28] sm:$0xf]
    %v2916 = vld [vmem:[#allocation13 + $0x2c] sm:$0xf]
    %v2917 = vld [vmem:[#allocation13 + $0x30] sm:$0xf]
    %v2918 = vld [vmem:[#allocation13 + $0x34] sm:$0xf]
    %v2919 = vld [vmem:[#allocation13 + $0x38] sm:$0xf]
    %v2920 = vld [vmem:[#allocation13 + $0x3c] sm:$0xf]
    %v2921 = vld [vmem:[%s10] sm:$0x1]
    %v2923 = vperm.slane %v2921, 0
    %v2941 = vunpack.c.l.b16 %v2905
    %v2942 = vunpack.c.l.b16 %v2906
    %v2943 = vunpack.c.l.b16 %v2907
    %v2944 = vunpack.c.l.b16 %v2908
    %v2945 = vunpack.c.l.b16 %v2909
    %v2946 = vunpack.c.l.b16 %v2910
    %v2947 = vunpack.c.l.b16 %v2911
    %v2948 = vunpack.c.l.b16 %v2912
    %v2949 = vunpack.c.l.b16 %v2913
    %v2950 = vunpack.c.l.b16 %v2914
    %v2951 = vunpack.c.l.b16 %v2915
    %v2952 = vunpack.c.l.b16 %v2916
    %v2953 = vunpack.c.l.b16 %v2917
    %v2954 = vunpack.c.l.b16 %v2918
    %v2955 = vunpack.c.l.b16 %v2919
    %v2956 = vunpack.c.l.b16 %v2920
    %v2957 = vpack.c.b16 %v2942, %v2941
    %v2958 = vpack.c.b16 %v2944, %v2943
    %v2959 = vpack.c.b16 %v2946, %v2945
    %v2960 = vpack.c.b16 %v2948, %v2947
    %v2961 = vpack.c.b16 %v2950, %v2949
    %v2962 = vpack.c.b16 %v2952, %v2951
    %v2963 = vpack.c.b16 %v2954, %v2953
    %v2964 = vpack.c.b16 %v2956, %v2955
    %2973 = vmatpush.bf16.msra.mxu0 %v2964
    %2974 = vmatpush.bf16.msra.mxu0 %v2963
    %2975 = vmatpush.bf16.msra.mxu0 %v2962
    %2976 = vmatpush.bf16.msra.mxu0 %v2961
    %2977 = vmatpush.bf16.msra.mxu0 %v2960
    %2978 = vmatpush.bf16.msra.mxu0 %v2959
    %2979 = vmatpush.bf16.msra.mxu0 %v2958
    %2980 = vmatpush.bf16.msra.mxu0 %v2957
    %2981 = vmatmul.bf16.gmra.mxu0 %v2903
    %v2982 = vpop.f32.mrf.mxu0
    %v2983 = vadd.f32 %v2923, %v2982
    %v2984 = vpop.f32.mrf.mxu0
    %v2985 = vadd.f32 %v2923, %v2984
    %2986 = vmatmul.bf16.gmra.mxu0 %v2904
    %v2987 = vpop.f32.mrf.mxu0
    %v2988 = vadd.f32 %v2923, %v2987
    %v2989 = vpop.f32.mrf.mxu0
    %2990 = vdwg.mxu0
    %2991 = vst [vmem:[#allocation14] sm:$0xff] %v2983
    %2992 = vst [vmem:[#allocation14 + $0x8] sm:$0xff] %v2985
    %2993 = vst [vmem:[#allocation14 + $0x10] sm:$0xff] %v2988
    // Predicated region
    $region74: #{tpu_custom_call.1} parent=1 // pred_check
      _
    $region75: #{tpu_custom_call.1} parent=1 // pred_check_branch
      %2995 = sbr.rel (0) target = $region77
    $region76: #{tpu_custom_call.1} parent=1 // pred_region
      %2997 = vsyncadd [#allocation4], 0
      %s2998 = sshll.u32 [#allocation14], 4
      %s2999 = int_to_ptr.vmem [resolvable:$true] %s2998
      %s3000 = sshll.u32 %s11, 4
      %s3001 = int_to_ptr.hbm [resolvable:$true] %s3000
      %3006 = dma.vmem_to_hbm [thread:$0]  %s2999, 384, %s3001, [#allocation4], 128, 128, 8
    $region77: #{tpu_custom_call.1} parent=1 // pred_fallthru
      _
    // Predicated region
    $region78: #{tpu_custom_call.1} parent=1 // pred_check
      _
    $region79: #{tpu_custom_call.1} parent=1 // pred_check_branch
      %3008 = sbr.rel (0) target = $region81
    $region80: #{tpu_custom_call.1} parent=1 // pred_region
      %3010 = dma.done [#allocation4], 384
    $region81: #{tpu_custom_call.1} parent=1 // pred_fallthru
      _
    %3011 = vsyncpa [#allocation3], 1
    %3012 = vsyncpa [#allocation6], 1
    %3013 = vsyncpa [#allocation9], 1
    %3014 = vsyncpa [#allocation12], 1
    %3015 = vsyncpa [#allocation4], 1

</llo_original>
